<compile_context>
chip_gen: v7x
topology: tpu7x:2x2x1
jax: 0.10.0
libtpu: 0.0.40
codegen_flags: <defaults>
</compile_context>

<pallas_src>
import jax
import jax.numpy as jnp
from jax.experimental import pallas as pl
from jax.experimental.pallas import tpu as pltpu


# --------------------------------------------------------------------------------------
# Kernel
# --------------------------------------------------------------------------------------
def esm_attention1d_kernel(x_ref, len_ref, wa_ref, ba_ref, wl_ref, bl_ref,
                           wf_ref, bf_ref, out_ref):
    """One batch tile of the full ESMAttention1d forward.

    x_ref  : (TN, L, D)  ESM embeddings                          (f32)
    len_ref: (TN, 1, 1)  valid sequence length per row           (int32)
    wa_ref : (1, D)      attention conv (k=1) weight, lane-major
    ba_ref : (1, 1)      attention conv bias
    wl_ref : (D, D)      Linear(D, D) weight, (in, out) layout
    bl_ref : (1, D)      Linear(D, D) bias
    wf_ref : (1, D)      Linear(D, 1) weight, lane-major
    bf_ref : (1, 1)      Linear(D, 1) bias
    out_ref: (TN, 1, 1)
    """
    x = x_ref[...]                                    # (TN, L, D)
    lens = len_ref[...]                               # (TN, 1, 1) int32
    tn, seq_len, _ = x.shape

    # --- Attention1d: kernel-size-1 conv == per-position dot with wa ------------------
    # Broadcast-multiply (VPU) + lane reduction (XLU); keeps L on sublanes, D on lanes.
    wa = wa_ref[...]                                  # (1, D)
    logits = jnp.sum(x * wa[None, :, :], axis=-1, keepdims=True)     # (TN, L, 1)
    logits = logits + ba_ref[...]                     # (1, 1) broadcasts

    # Padding mask rebuilt in-kernel from lengths (no lane-sparse (N, L, 1) HBM stream).
    pos = jax.lax.broadcasted_iota(jnp.int32, (tn, seq_len, 1), 1)
    logits = jnp.where(pos < lens, logits, -jnp.inf)

    # --- softmax over the sequence (sublane) axis with deferred normalization ---------
    lmax = jnp.max(logits, axis=1, keepdims=True)     # (TN, 1, 1)
    p = jnp.exp(logits - lmax)                        # EUP; exp(-inf) -> 0 on padded rows
    denom = jnp.sum(p, axis=1)                        # (TN, 1)
    pooled_un = jnp.sum(p * x, axis=1)                # (TN, D) unnormalized pooling
    # Normalize once per row (pl.reciprocal; exact to preserve 1e-4 tolerance).
    pooled = pooled_un * pl.reciprocal(denom, approx=False)          # (TN, D)

    # --- relu(Linear(D, D)) on the MXU -------------------------------------------------
    h = jnp.dot(pooled, wl_ref[...],
                preferred_element_type=jnp.float32) + bl_ref[...]
    h = jnp.maximum(h, 0.0)                           # (TN, D)

    # --- final Linear(D, 1): VPU multiply + lane reduce (MXU matvec would be 1/256 wide)
    out = jnp.sum(h * wf_ref[...], axis=-1, keepdims=True) + bf_ref[...]   # (TN, 1)
    out_ref[...] = out.reshape(out_ref.shape)


# --------------------------------------------------------------------------------------
# VMEM / generation-aware tiling helpers
# --------------------------------------------------------------------------------------
def _round_up(v, m):
    return ((v + m - 1) // m) * m


def _padded_f32_bytes(shape):
    """f32 VMEM footprint of an array with (8, 128) tiling on the last two dims."""
    shape = tuple(int(s) for s in shape)
    if len(shape) == 1:
        shape = (1,) + shape
    lead = 1
    for s in shape[:-2]:
        lead *= s
    return lead * _round_up(shape[-2], 8) * _round_up(shape[-1], 128) * 4


def _vmem_capacity_bytes():
    """Per-TensorCore VMEM capacity (generation-aware, with safe fallbacks)."""
    try:
        cap = int(getattr(pltpu.get_tpu_info(), "vmem_capacity_bytes", 0) or 0)
        if cap > 0:
            return cap
    except Exception:
        pass
    try:
        kind = jax.devices()[0].device_kind.lower()
    except Exception:
        kind = ""
    if "v7" in kind:
        return 64 * 1024 * 1024          # v7x: 64 MiB per TensorCore
    return 128 * 1024 * 1024             # v5e / v6e / v5p


def _num_parallel_cores():
    """TensorCores a single pallas_call grid can shard across (grid >= this on v7x)."""
    try:
        kind = jax.devices()[0].device_kind.lower()
    except Exception:
        return 1
    return 2 if any(t in kind for t in ("v7", "v5p", "v4")) else 1


def _pick_batch_tile(n, seq_len, d_model, *, vmem_limit_bytes, min_grid):
    """Largest divisor of n whose double-buffered streaming blocks + params fit in VMEM."""
    x_elem = _round_up(seq_len, 8) * _round_up(d_model, 128) * 4   # one batch row of x
    small_elem = 8 * 128 * 4                                       # lengths / output plane
    per_elem = 2 * (x_elem + 2 * small_elem)                       # double-buffered streams
    param_bytes = sum(_padded_f32_bytes(s) for s in
                      ((1, d_model), (1, 1), (d_model, d_model),
                       (1, d_model), (1, d_model), (1, 1)))
    # Conservative: budget params as double-buffered even though Buffered(1) is requested.
    budget = vmem_limit_bytes - 2 * param_bytes - (2 << 20)
    max_tn = max(1, budget // per_elem)
    if min_grid > 1 and n >= min_grid:
        max_tn = min(max_tn, n // min_grid)        # keep >= min_grid steps for multi-core parts
    max_tn = int(max(1, min(max_tn, n)))
    divisors = [t for t in range(1, n + 1) if n % t == 0 and t <= max_tn]
    mult8 = [t for t in divisors if t % 8 == 0]    # prefer sublane/MXU-aligned tiles
    return (mult8 or divisors)[-1]


# --------------------------------------------------------------------------------------
# Wrapper
# --------------------------------------------------------------------------------------
def esm_attention1d_forward(x, input_mask, params, *, batch_tile=None):
    """x: (N, L, D) f32, input_mask: (N, L) (1 = valid, 0 = pad) -> (N, 1) f32.

    Assumes input_mask is a standard prefix padding mask (a run of 1s followed by 0s), as
    produced by the FLIP dataloaders; the kernel streams per-row lengths and rebuilds the
    mask in-kernel.  For best lane utilization use L % 8 == 0 and D % 128 == 0.
    """
    N, L, D = x.shape
    wa, ba, wl, bl, wf, bf = params

    vmem_cap = _vmem_capacity_bytes()
    vmem_limit = int(min(vmem_cap * 3 // 4, 100 * 1024 * 1024))   # ~48 MiB v7x, ~96 MiB v5e/v6e
    min_grid = _num_parallel_cores()

    TN = batch_tile if batch_tile is not None else _pick_batch_tile(
        N, L, D, vmem_limit_bytes=vmem_limit, min_grid=min_grid)
    assert N % TN == 0, "batch tile must divide batch"
    grid = (N // TN,)

    # Per-row valid lengths (prefix-mask assumption), streamed as a tiny (N, 1, 1) int32 input.
    lengths = jnp.sum(input_mask > 0, axis=-1).astype(jnp.int32).reshape(N, 1, 1)

    # Advisory cost so XLA schedules the custom call sensibly relative to neighbors.
    flops = int(2 * N * L * D          # attention logits
                + 8 * N * L            # softmax elementwise
                + 2 * N * L * D        # attention pooling
                + 2 * N * D * D        # Linear(D, D)
                + 2 * N * D)           # Linear(D, 1)
    bytes_accessed = int(4 * (x.size + N + wa.size + ba.size + wl.size
                              + bl.size + wf.size + bf.size + N))
    cost = pl.CostEstimate(flops=flops, transcendentals=int(N * L),
                           bytes_accessed=bytes_accessed)

    def build(single_buffered_params):
        def pspec(shape):
            idx = lambda i: (0,) * len(shape)
            if single_buffered_params:
                # Constant block index -> no need for a second buffer; saves a wl copy in VMEM.
                return pl.BlockSpec(shape, idx, pipeline_mode=pl.Buffered(1))
            return pl.BlockSpec(shape, idx)

        return pl.pallas_call(
            esm_attention1d_kernel,
            out_shape=jax.ShapeDtypeStruct((N, 1, 1), jnp.float32),
            grid=grid,
            in_specs=[
                pl.BlockSpec((TN, L, D), lambda i: (i, 0, 0)),   # x        (batch-tiled stream)
                pl.BlockSpec((TN, 1, 1), lambda i: (i, 0, 0)),   # lengths  (tiny stream)
                pspec((1, D)),                                   # wa       (resident)
                pspec((1, 1)),                                   # ba
                pspec((D, D)),                                   # wl
                pspec((1, D)),                                   # bl
                pspec((1, D)),                                   # wf
                pspec((1, 1)),                                   # bf
            ],
            out_specs=pl.BlockSpec((TN, 1, 1), lambda i: (i, 0, 0)),
            compiler_params=pltpu.CompilerParams(
                dimension_semantics=("parallel",),               # shard batch across TCs
                vmem_limit_bytes=vmem_limit,                     # generation-aware limit
            ),
            cost_estimate=cost,
        )

    args = (x, lengths, wa, ba, wl, bl, wf, bf)
    try:
        out3 = build(single_buffered_params=True)(*args)
    except Exception:
        # Fallback for jax versions that reject pipeline_mode=pl.Buffered(1).
        out3 = build(single_buffered_params=False)(*args)

    return out3.reshape(N, 1)


# --------------------------------------------------------------------------------------
# Pure-JAX reference and demo
# --------------------------------------------------------------------------------------
def reference_forward(x, mask, params):
    """Pure-JAX reference mirroring the PyTorch ESMAttention1d forward (eval mode)."""
    wa, ba, wl, bl, wf, bf = params
    logits = jnp.einsum('nld,d->nl', x, wa[0]) + ba[0, 0]       # Conv1d(D,1,k=1)
    logits = jnp.where(mask > 0, logits, -jnp.inf)              # masked_fill_(-inf)
    attn = jax.nn.softmax(logits, axis=-1)
    pooled = jnp.einsum('nl,nld->nd', attn, x)                  # (attn * x).sum(dim=1)
    h = jax.nn.relu(pooled @ wl + bl)
    return h @ wf.T + bf                                        # (N, 1)


def init_params(key, d):
    """Deterministic params. Weights stored (in, out) / lane-major so no in-kernel transpose."""
    ks = jax.random.split(key, 6)
    b = 1.0 / (d ** 0.5)
    wa = jax.random.uniform(ks[0], (1, d), jnp.float32, -b, b)   # attention conv weight (k=1)
    ba = jax.random.uniform(ks[1], (1, 1), jnp.float32, -b, b)
    wl = jax.random.uniform(ks[2], (d, d), jnp.float32, -b, b)   # Linear(D, D), (in, out)
    bl = jax.random.uniform(ks[3], (1, d), jnp.float32, -b, b)
    wf = jax.random.uniform(ks[4], (1, d), jnp.float32, -b, b)   # Linear(D, 1), lane-major
    bf = jax.random.uniform(ks[5], (1, 1), jnp.float32, -b, b)
    return wa, ba, wl, bl, wf, bf


if __name__ == "__main__":
    # Small shapes consistent with the module: batch=8, seq=16, d_embedding=128
    # (L multiple of 8, D multiple of 128 -> lane/sublane aligned).
    N, L, D = 8, 16, 128

    key = jax.random.PRNGKey(0)
    kx, kl, kp = jax.random.split(key, 3)

    x = jax.random.normal(kx, (N, L, D), jnp.float32)            # "ESM embeddings"
    lengths = jax.random.randint(kl, (N,), 1, L + 1)             # >= 1 valid token per row
    mask = (jnp.arange(L)[None, :] < lengths[:, None]).astype(jnp.float32)

    params = init_params(kp, D)
    ref = reference_forward(x, mask, params)

    # Auto tile: VMEM-derived, generation-aware (single grid step on 1-TC parts).
    out_auto = jax.block_until_ready(esm_attention1d_forward(x, mask, params))
    # Explicit small tile: multi-step batch-parallel grid, exercising the pipelined path.
    out_tiled = jax.block_until_ready(esm_attention1d_forward(x, mask, params, batch_tile=2))

    assert out_auto.shape == (N, 1) and out_tiled.shape == (N, 1)
    assert jnp.allclose(out_auto, ref, rtol=1e-4, atol=1e-4), (out_auto, ref)
    assert jnp.allclose(out_tiled, ref, rtol=1e-4, atol=1e-4), (out_tiled, ref)
    print("KERNEL_OK")
</pallas_src>

<mosaic_0001>
module attributes {stable_mosaic.version = 11 : i64} {
  func.func @esm_attention1d_kernel(%arg0: i32, %arg1: memref<8x16x128xf32, #tpu.memory_space<vmem>>, %arg2: memref<8x1x1xi32, #tpu.memory_space<vmem>>, %arg3: memref<1x128xf32, #tpu.memory_space<vmem>>, %arg4: memref<1x1xf32, #tpu.memory_space<vmem>>, %arg5: memref<128x128xf32, #tpu.memory_space<vmem>>, %arg6: memref<1x128xf32, #tpu.memory_space<vmem>>, %arg7: memref<1x128xf32, #tpu.memory_space<vmem>>, %arg8: memref<1x1xf32, #tpu.memory_space<vmem>>, %arg9: memref<8x1x1xf32, #tpu.memory_space<vmem>>) attributes {dimension_semantics = [#tpu.dimension_semantics<parallel>], iteration_bounds = array<i64: 1>, scalar_prefetch = 0 : i64, scratch_operands = 0 : i64, tpu.core_type = #tpu.core_type<tc>, window_params = [{transform_indices = @transform_0, window_bounds = array<i64: 8, 16, 128>}, {transform_indices = @transform_1, window_bounds = array<i64: 8, 1, 1>}, {pipeline_mode = #tpu.pipeline_mode<synchronous>, transform_indices = @transform_2, window_bounds = array<i64: 1, 128>}, {pipeline_mode = #tpu.pipeline_mode<synchronous>, transform_indices = @transform_3, window_bounds = array<i64: 1, 1>}, {pipeline_mode = #tpu.pipeline_mode<synchronous>, transform_indices = @transform_4, window_bounds = array<i64: 128, 128>}, {pipeline_mode = #tpu.pipeline_mode<synchronous>, transform_indices = @transform_5, window_bounds = array<i64: 1, 128>}, {pipeline_mode = #tpu.pipeline_mode<synchronous>, transform_indices = @transform_6, window_bounds = array<i64: 1, 128>}, {pipeline_mode = #tpu.pipeline_mode<synchronous>, transform_indices = @transform_7, window_bounds = array<i64: 1, 1>}, {transform_indices = @transform_8, window_bounds = array<i64: 8, 1, 1>}]} {
    %c0 = arith.constant 0 : index
    %c0_0 = arith.constant 0 : index
    %c0_1 = arith.constant 0 : index
    %0 = vector.load %arg1[%c0, %c0_0, %c0_1] : memref<8x16x128xf32, #tpu.memory_space<vmem>>, vector<8x16x128xf32>
    %c0_2 = arith.constant 0 : index
    %c0_3 = arith.constant 0 : index
    %c0_4 = arith.constant 0 : index
    %1 = vector.load %arg2[%c0_2, %c0_3, %c0_4] : memref<8x1x1xi32, #tpu.memory_space<vmem>>, vector<8x1x1xi32>
    %c0_5 = arith.constant 0 : index
    %c0_6 = arith.constant 0 : index
    %2 = vector.load %arg3[%c0_5, %c0_6] : memref<1x128xf32, #tpu.memory_space<vmem>>, vector<1x128xf32>
    %3 = vector.shape_cast %2 : vector<1x128xf32> to vector<1x1x128xf32>
    %4 = vector.broadcast %3 : vector<1x1x128xf32> to vector<8x16x128xf32>
    %5 = arith.mulf %0, %4 : vector<8x16x128xf32>
    %cst = arith.constant dense<0.000000e+00> : vector<8x16xf32>
    %6 = vector.multi_reduction <add>, %5, %cst [2] : vector<8x16x128xf32> to vector<8x16xf32>
    %7 = vector.shape_cast %6 : vector<8x16xf32> to vector<8x16x1xf32>
    %c0_7 = arith.constant 0 : index
    %c0_8 = arith.constant 0 : index
    %8 = vector.load %arg4[%c0_7, %c0_8] : memref<1x1xf32, #tpu.memory_space<vmem>>, vector<1x1xf32>
    %9 = vector.shape_cast %8 : vector<1x1xf32> to vector<1x1x1xf32>
    %10 = vector.broadcast %9 : vector<1x1x1xf32> to vector<8x16x1xf32>
    %11 = arith.addf %7, %10 : vector<8x16x1xf32>
    %12 = tpu.iota {dimensions = array<i32: 1>} : vector<8x16x1xi32>
    %13 = vector.broadcast %1 : vector<8x1x1xi32> to vector<8x16x1xi32>
    %14 = arith.cmpi slt, %12, %13 : vector<8x16x1xi32>
    %cst_9 = arith.constant 0xFF800000 : f32
    %15 = vector.broadcast %cst_9 : f32 to vector<8x16x1xf32>
    %16 = arith.select %14, %11, %15 : vector<8x16x1xi1>, vector<8x16x1xf32>
    %cst_10 = arith.constant dense<0xFF800000> : vector<8x1xf32>
    %17 = vector.multi_reduction <maximumf>, %16, %cst_10 [1] : vector<8x16x1xf32> to vector<8x1xf32>
    %18 = vector.shape_cast %17 : vector<8x1xf32> to vector<8x1x1xf32>
    %19 = vector.broadcast %18 : vector<8x1x1xf32> to vector<8x16x1xf32>
    %20 = arith.subf %16, %19 : vector<8x16x1xf32>
    %21 = math.exp %20 : vector<8x16x1xf32>
    %cst_11 = arith.constant dense<0.000000e+00> : vector<8x1xf32>
    %22 = vector.multi_reduction <add>, %21, %cst_11 [1] : vector<8x16x1xf32> to vector<8x1xf32>
    %23 = vector.broadcast %21 : vector<8x16x1xf32> to vector<8x16x128xf32>
    %24 = arith.mulf %23, %0 : vector<8x16x128xf32>
    %cst_12 = arith.constant dense<0.000000e+00> : vector<8x128xf32>
    %25 = vector.multi_reduction <add>, %24, %cst_12 [1] : vector<8x16x128xf32> to vector<8x128xf32>
    %26 = tpu.reciprocal %22 : vector<8x1xf32> -> vector<8x1xf32>
    %27 = vector.broadcast %26 : vector<8x1xf32> to vector<8x128xf32>
    %28 = arith.mulf %25, %27 : vector<8x128xf32>
    %c0_13 = arith.constant 0 : index
    %c0_14 = arith.constant 0 : index
    %29 = vector.load %arg5[%c0_13, %c0_14] : memref<128x128xf32, #tpu.memory_space<vmem>>, vector<128x128xf32>
    %cst_15 = arith.constant dense<0.000000e+00> : vector<8x128xf32>
    %30 = tpu.matmul %28, %29, %cst_15 {dimension_numbers = #tpu.dot_dimension_numbers<[1], [0], [0], [1], [0, 0, 1, 1], [], []>} : vector<8x128xf32>, vector<128x128xf32>, vector<8x128xf32> -> vector<8x128xf32>
    %c0_16 = arith.constant 0 : index
    %c0_17 = arith.constant 0 : index
    %31 = vector.load %arg6[%c0_16, %c0_17] : memref<1x128xf32, #tpu.memory_space<vmem>>, vector<1x128xf32>
    %32 = vector.broadcast %31 : vector<1x128xf32> to vector<8x128xf32>
    %33 = arith.addf %30, %32 : vector<8x128xf32>
    %cst_18 = arith.constant 0.000000e+00 : f32
    %34 = vector.broadcast %cst_18 : f32 to vector<8x128xf32>
    %35 = arith.maximumf %33, %34 : vector<8x128xf32>
    %c0_19 = arith.constant 0 : index
    %c0_20 = arith.constant 0 : index
    %36 = vector.load %arg7[%c0_19, %c0_20] : memref<1x128xf32, #tpu.memory_space<vmem>>, vector<1x128xf32>
    %37 = vector.broadcast %36 : vector<1x128xf32> to vector<8x128xf32>
    %38 = arith.mulf %35, %37 : vector<8x128xf32>
    %cst_21 = arith.constant dense<0.000000e+00> : vector<8xf32>
    %39 = vector.multi_reduction <add>, %38, %cst_21 [1] : vector<8x128xf32> to vector<8xf32>
    %40 = vector.shape_cast %39 : vector<8xf32> to vector<8x1xf32>
    %c0_22 = arith.constant 0 : index
    %c0_23 = arith.constant 0 : index
    %41 = vector.load %arg8[%c0_22, %c0_23] : memref<1x1xf32, #tpu.memory_space<vmem>>, vector<1x1xf32>
    %42 = vector.broadcast %41 : vector<1x1xf32> to vector<8x1xf32>
    %43 = arith.addf %40, %42 : vector<8x1xf32>
    %44 = vector.shape_cast %43 : vector<8x1xf32> to vector<8x1x1xf32>
    %c0_24 = arith.constant 0 : index
    %c0_25 = arith.constant 0 : index
    %c0_26 = arith.constant 0 : index
    %45 = vector.load %arg9[%c0_24, %c0_25, %c0_26] : memref<8x1x1xf32, #tpu.memory_space<vmem>>, vector<8x1x1xf32>
    tpu.vector_store %arg9[%c0_24, %c0_25, %c0_26], %44 {strides = array<i32>} : memref<8x1x1xf32, #tpu.memory_space<vmem>>, vector<8x1x1xf32>,
    return
  }
  func.func @transform_0(%arg0: i32) -> (i32, i32, i32) {
    %c0_i32 = arith.constant 0 : i32
    %c0_i32_0 = arith.constant 0 : i32
    %c0_i32_1 = arith.constant 0 : i32
    return %arg0, %c0_i32, %c0_i32_0 : i32, i32, i32
  }
  func.func @transform_1(%arg0: i32) -> (i32, i32, i32) {
    %c0_i32 = arith.constant 0 : i32
    %c0_i32_0 = arith.constant 0 : i32
    %c0_i32_1 = arith.constant 0 : i32
    return %arg0, %c0_i32, %c0_i32_0 : i32, i32, i32
  }
  func.func @transform_2(%arg0: i32) -> (i32, i32) {
    %c0_i32 = arith.constant 0 : i32
    %c0_i32_0 = arith.constant 0 : i32
    %c0_i32_1 = arith.constant 0 : i32
    return %c0_i32, %c0_i32_0 : i32, i32
  }
  func.func @transform_3(%arg0: i32) -> (i32, i32) {
    %c0_i32 = arith.constant 0 : i32
    %c0_i32_0 = arith.constant 0 : i32
    %c0_i32_1 = arith.constant 0 : i32
    return %c0_i32, %c0_i32_0 : i32, i32
  }
  func.func @transform_4(%arg0: i32) -> (i32, i32) {
    %c0_i32 = arith.constant 0 : i32
    %c0_i32_0 = arith.constant 0 : i32
    %c0_i32_1 = arith.constant 0 : i32
    return %c0_i32, %c0_i32_0 : i32, i32
  }
  func.func @transform_5(%arg0: i32) -> (i32, i32) {
    %c0_i32 = arith.constant 0 : i32
    %c0_i32_0 = arith.constant 0 : i32
    %c0_i32_1 = arith.constant 0 : i32
    return %c0_i32, %c0_i32_0 : i32, i32
  }
  func.func @transform_6(%arg0: i32) -> (i32, i32) {
    %c0_i32 = arith.constant 0 : i32
    %c0_i32_0 = arith.constant 0 : i32
    %c0_i32_1 = arith.constant 0 : i32
    return %c0_i32, %c0_i32_0 : i32, i32
  }
  func.func @transform_7(%arg0: i32) -> (i32, i32) {
    %c0_i32 = arith.constant 0 : i32
    %c0_i32_0 = arith.constant 0 : i32
    %c0_i32_1 = arith.constant 0 : i32
    return %c0_i32, %c0_i32_0 : i32, i32
  }
  func.func @transform_8(%arg0: i32) -> (i32, i32, i32) {
    %c0_i32 = arith.constant 0 : i32
    %c0_i32_0 = arith.constant 0 : i32
    %c0_i32_1 = arith.constant 0 : i32
    return %arg0, %c0_i32, %c0_i32_0 : i32, i32, i32
  }
}

module attributes {stable_mosaic.version = 11 : i64} {
  func.func @esm_attention1d_kernel(%arg0: i32, %arg1: memref<8x16x128xf32, #tpu.memory_space<vmem>>, %arg2: memref<8x1x1xi32, #tpu.memory_space<vmem>>, %arg3: memref<1x128xf32, #tpu.memory_space<vmem>>, %arg4: memref<1x1xf32, #tpu.memory_space<vmem>>, %arg5: memref<128x128xf32, #tpu.memory_space<vmem>>, %arg6: memref<1x128xf32, #tpu.memory_space<vmem>>, %arg7: memref<1x128xf32, #tpu.memory_space<vmem>>, %arg8: memref<1x1xf32, #tpu.memory_space<vmem>>, %arg9: memref<8x1x1xf32, #tpu.memory_space<vmem>>) attributes {dimension_semantics = [#tpu.dimension_semantics<parallel>], iteration_bounds = array<i64: 1>, scalar_prefetch = 0 : i64, scratch_operands = 0 : i64, tpu.core_type = #tpu.core_type<tc>, window_params = [{transform_indices = @transform_0, window_bounds = array<i64: 8, 16, 128>}, {transform_indices = @transform_1, window_bounds = array<i64: 8, 1, 1>}, {pipeline_mode = #tpu.pipeline_mode<synchronous>, transform_indices = @transform_2, window_bounds = array<i64: 1, 128>}, {pipeline_mode = #tpu.pipeline_mode<synchronous>, transform_indices = @transform_3, window_bounds = array<i64: 1, 1>}, {pipeline_mode = #tpu.pipeline_mode<synchronous>, transform_indices = @transform_4, window_bounds = array<i64: 128, 128>}, {pipeline_mode = #tpu.pipeline_mode<synchronous>, transform_indices = @transform_5, window_bounds = array<i64: 1, 128>}, {pipeline_mode = #tpu.pipeline_mode<synchronous>, transform_indices = @transform_6, window_bounds = array<i64: 1, 128>}, {pipeline_mode = #tpu.pipeline_mode<synchronous>, transform_indices = @transform_7, window_bounds = array<i64: 1, 1>}, {transform_indices = @transform_8, window_bounds = array<i64: 8, 1, 1>}]} {
    %c0 = arith.constant 0 : index
    %c0_0 = arith.constant 0 : index
    %c0_1 = arith.constant 0 : index
    %0 = vector.load %arg1[%c0, %c0_0, %c0_1] : memref<8x16x128xf32, #tpu.memory_space<vmem>>, vector<8x16x128xf32>
    %c0_2 = arith.constant 0 : index
    %c0_3 = arith.constant 0 : index
    %c0_4 = arith.constant 0 : index
    %1 = vector.load %arg2[%c0_2, %c0_3, %c0_4] : memref<8x1x1xi32, #tpu.memory_space<vmem>>, vector<8x1x1xi32>
    %c0_5 = arith.constant 0 : index
    %c0_6 = arith.constant 0 : index
    %2 = vector.load %arg3[%c0_5, %c0_6] : memref<1x128xf32, #tpu.memory_space<vmem>>, vector<1x128xf32>
    %3 = vector.shape_cast %2 : vector<1x128xf32> to vector<1x1x128xf32>
    %4 = vector.broadcast %3 : vector<1x1x128xf32> to vector<8x16x128xf32>
    %5 = arith.mulf %0, %4 : vector<8x16x128xf32>
    %cst = arith.constant dense<0.000000e+00> : vector<8x16xf32>
    %6 = vector.multi_reduction <add>, %5, %cst [2] : vector<8x16x128xf32> to vector<8x16xf32>
    %7 = vector.shape_cast %6 : vector<8x16xf32> to vector<8x16x1xf32>
    %c0_7 = arith.constant 0 : index
    %c0_8 = arith.constant 0 : index
    %8 = vector.load %arg4[%c0_7, %c0_8] : memref<1x1xf32, #tpu.memory_space<vmem>>, vector<1x1xf32>
    %9 = vector.shape_cast %8 : vector<1x1xf32> to vector<1x1x1xf32>
    %10 = vector.broadcast %9 : vector<1x1x1xf32> to vector<8x16x1xf32>
    %11 = arith.addf %7, %10 : vector<8x16x1xf32>
    %12 = tpu.iota {dimensions = array<i32: 1>} : vector<8x16x1xi32>
    %13 = vector.broadcast %1 : vector<8x1x1xi32> to vector<8x16x1xi32>
    %14 = arith.cmpi slt, %12, %13 : vector<8x16x1xi32>
    %cst_9 = arith.constant 0xFF800000 : f32
    %15 = vector.broadcast %cst_9 : f32 to vector<8x16x1xf32>
    %16 = arith.select %14, %11, %15 : vector<8x16x1xi1>, vector<8x16x1xf32>
    %cst_10 = arith.constant dense<0xFF800000> : vector<8x1xf32>
    %17 = vector.multi_reduction <maximumf>, %16, %cst_10 [1] : vector<8x16x1xf32> to vector<8x1xf32>
    %18 = vector.shape_cast %17 : vector<8x1xf32> to vector<8x1x1xf32>
    %19 = vector.broadcast %18 : vector<8x1x1xf32> to vector<8x16x1xf32>
    %20 = arith.subf %16, %19 : vector<8x16x1xf32>
    %21 = math.exp %20 : vector<8x16x1xf32>
    %cst_11 = arith.constant dense<0.000000e+00> : vector<8x1xf32>
    %22 = vector.multi_reduction <add>, %21, %cst_11 [1] : vector<8x16x1xf32> to vector<8x1xf32>
    %23 = vector.broadcast %21 : vector<8x16x1xf32> to vector<8x16x128xf32>
    %24 = arith.mulf %23, %0 : vector<8x16x128xf32>
    %cst_12 = arith.constant dense<0.000000e+00> : vector<8x128xf32>
    %25 = vector.multi_reduction <add>, %24, %cst_12 [1] : vector<8x16x128xf32> to vector<8x128xf32>
    %26 = tpu.reciprocal %22 : vector<8x1xf32> -> vector<8x1xf32>
    %27 = vector.broadcast %26 : vector<8x1xf32> to vector<8x128xf32>
    %28 = arith.mulf %25, %27 : vector<8x128xf32>
    %c0_13 = arith.constant 0 : index
    %c0_14 = arith.constant 0 : index
    %29 = vector.load %arg5[%c0_13, %c0_14] : memref<128x128xf32, #tpu.memory_space<vmem>>, vector<128x128xf32>
    %cst_15 = arith.constant dense<0.000000e+00> : vector<8x128xf32>
    %30 = tpu.matmul %28, %29, %cst_15 {dimension_numbers = #tpu.dot_dimension_numbers<[1], [0], [0], [1], [0, 0, 1, 1], [], []>} : vector<8x128xf32>, vector<128x128xf32>, vector<8x128xf32> -> vector<8x128xf32>
    %c0_16 = arith.constant 0 : index
    %c0_17 = arith.constant 0 : index
    %31 = vector.load %arg6[%c0_16, %c0_17] : memref<1x128xf32, #tpu.memory_space<vmem>>, vector<1x128xf32>
    %32 = vector.broadcast %31 : vector<1x128xf32> to vector<8x128xf32>
    %33 = arith.addf %30, %32 : vector<8x128xf32>
    %cst_18 = arith.constant 0.000000e+00 : f32
    %34 = vector.broadcast %cst_18 : f32 to vector<8x128xf32>
    %35 = arith.maximumf %33, %34 : vector<8x128xf32>
    %c0_19 = arith.constant 0 : index
    %c0_20 = arith.constant 0 : index
    %36 = vector.load %arg7[%c0_19, %c0_20] : memref<1x128xf32, #tpu.memory_space<vmem>>, vector<1x128xf32>
    %37 = vector.broadcast %36 : vector<1x128xf32> to vector<8x128xf32>
    %38 = arith.mulf %35, %37 : vector<8x128xf32>
    %cst_21 = arith.constant dense<0.000000e+00> : vector<8xf32>
    %39 = vector.multi_reduction <add>, %38, %cst_21 [1] : vector<8x128xf32> to vector<8xf32>
    %40 = vector.shape_cast %39 : vector<8xf32> to vector<8x1xf32>
    %c0_22 = arith.constant 0 : index
    %c0_23 = arith.constant 0 : index
    %41 = vector.load %arg8[%c0_22, %c0_23] : memref<1x1xf32, #tpu.memory_space<vmem>>, vector<1x1xf32>
    %42 = vector.broadcast %41 : vector<1x1xf32> to vector<8x1xf32>
    %43 = arith.addf %40, %42 : vector<8x1xf32>
    %44 = vector.shape_cast %43 : vector<8x1xf32> to vector<8x1x1xf32>
    %c0_24 = arith.constant 0 : index
    %c0_25 = arith.constant 0 : index
    %c0_26 = arith.constant 0 : index
    %45 = vector.load %arg9[%c0_24, %c0_25, %c0_26] : memref<8x1x1xf32, #tpu.memory_space<vmem>>, vector<8x1x1xf32>
    tpu.vector_store %arg9[%c0_24, %c0_25, %c0_26], %44 {strides = array<i32>} : memref<8x1x1xf32, #tpu.memory_space<vmem>>, vector<8x1x1xf32>,
    return
  }
  func.func @transform_0(%arg0: i32) -> (i32, i32, i32) {
    %c0_i32 = arith.constant 0 : i32
    %c0_i32_0 = arith.constant 0 : i32
    %c0_i32_1 = arith.constant 0 : i32
    return %arg0, %c0_i32, %c0_i32_0 : i32, i32, i32
  }
  func.func @transform_1(%arg0: i32) -> (i32, i32, i32) {
    %c0_i32 = arith.constant 0 : i32
    %c0_i32_0 = arith.constant 0 : i32
    %c0_i32_1 = arith.constant 0 : i32
    return %arg0, %c0_i32, %c0_i32_0 : i32, i32, i32
  }
  func.func @transform_2(%arg0: i32) -> (i32, i32) {
    %c0_i32 = arith.constant 0 : i32
    %c0_i32_0 = arith.constant 0 : i32
    %c0_i32_1 = arith.constant 0 : i32
    return %c0_i32, %c0_i32_0 : i32, i32
  }
  func.func @transform_3(%arg0: i32) -> (i32, i32) {
    %c0_i32 = arith.constant 0 : i32
    %c0_i32_0 = arith.constant 0 : i32
    %c0_i32_1 = arith.constant 0 : i32
    return %c0_i32, %c0_i32_0 : i32, i32
  }
  func.func @transform_4(%arg0: i32) -> (i32, i32) {
    %c0_i32 = arith.constant 0 : i32
    %c0_i32_0 = arith.constant 0 : i32
    %c0_i32_1 = arith.constant 0 : i32
    return %c0_i32, %c0_i32_0 : i32, i32
  }
  func.func @transform_5(%arg0: i32) -> (i32, i32) {
    %c0_i32 = arith.constant 0 : i32
    %c0_i32_0 = arith.constant 0 : i32
    %c0_i32_1 = arith.constant 0 : i32
    return %c0_i32, %c0_i32_0 : i32, i32
  }
  func.func @transform_6(%arg0: i32) -> (i32, i32) {
    %c0_i32 = arith.constant 0 : i32
    %c0_i32_0 = arith.constant 0 : i32
    %c0_i32_1 = arith.constant 0 : i32
    return %c0_i32, %c0_i32_0 : i32, i32
  }
  func.func @transform_7(%arg0: i32) -> (i32, i32) {
    %c0_i32 = arith.constant 0 : i32
    %c0_i32_0 = arith.constant 0 : i32
    %c0_i32_1 = arith.constant 0 : i32
    return %c0_i32, %c0_i32_0 : i32, i32
  }
  func.func @transform_8(%arg0: i32) -> (i32, i32, i32) {
    %c0_i32 = arith.constant 0 : i32
    %c0_i32_0 = arith.constant 0 : i32
    %c0_i32_1 = arith.constant 0 : i32
    return %arg0, %c0_i32, %c0_i32_0 : i32, i32, i32
  }
}

</mosaic_0001>

<llo_original>
// kernel: tpu_custom_call.1
$region0: #{tpu_custom_call.1}
  #allocation0 [shape = 'u32[]', space=smem, size = 0x4, offset = 0x4, fixed_abs, tag = 'smem constant byte address 0x4 - core index']
  #allocation1 [shape = 'u32[144,128]{1,0:T(1,128)}', space=vmem, size = 0x12000, scoped, tag = 'internal scratch']
  #allocation2 [shape = 'f32[1,1]{1,0:T(1,128)S(1)}', space=vmem, size = 0x200, scoped, tag = 'scoped memory for tpu_custom_call.1']
  #allocation3 [shape = 'f32[1,1]{1,0:T(1,128)S(1)}', space=vmem, size = 0x200, scoped, tag = 'scoped memory for tpu_custom_call.1']
  %s0 = inlined_call_operand.hbm [shape: f32[8,16,128], index: 0, kind: input, shape index: {}]
  %s1 = inlined_call_operand.hbm [shape: s32[8,1,1], index: 1, kind: input, shape index: {}]
  %s2 = inlined_call_operand.hbm [shape: f32[1,128], index: 2, kind: input, shape index: {}]
  %s3 = inlined_call_operand.<no memory space> [shape: f32[1,1], index: 3, kind: input, shape index: {}]
  %s4 = inlined_call_operand.hbm [shape: f32[128,128], index: 4, kind: input, shape index: {}]
  %s5 = inlined_call_operand.hbm [shape: f32[1,128], index: 5, kind: input, shape index: {}]
  %s6 = inlined_call_operand.hbm [shape: f32[1,128], index: 6, kind: input, shape index: {}]
  %s7 = inlined_call_operand.<no memory space> [shape: f32[1,1], index: 7, kind: input, shape index: {}]
  %s8 = inlined_call_operand.hbm [shape: f32[8,1,1], index: 8, kind: output, shape index: {}]
  %s9 = sld [smem:[#allocation0]]
  $region66: #{tpu_custom_call.1} parent=0
    _
  %s11 = ssub.s32 1, %s9
  %s12 = scalar_select 0, %s11, %s9
  %v13 = vstv %s3
  %14 = vst [vmem:[#allocation2] sm:$0x1] %v13
  %v15 = vstv %s7
  %16 = vst [vmem:[#allocation3] sm:$0x1] %v15
  $region1: #{tpu_custom_call.1} parent=0
    #allocation4 [shape = 'u8[65536]{0}', space=vmem, size = 0x10000, scoped, tag = 'input window, operand 0, single buffered']
    #allocation5 [shape = 's32[1]{0}', space=sflag, size = 0x4, scoped, tag = 'scoped memory for tpu_custom_call.1']
    #allocation6 [shape = 's32[1]{0}', space=sflag, size = 0x4, scoped, tag = 'scoped memory for tpu_custom_call.1']
    #allocation7 [shape = 'u8[4096]{0}', space=vmem, size = 0x1000, scoped, tag = 'input window, operand 1, single buffered']
    #allocation8 [shape = 's32[1]{0}', space=sflag, size = 0x4, scoped, tag = 'scoped memory for tpu_custom_call.1']
    #allocation9 [shape = 'u8[512]{0}', space=vmem, size = 0x400, scoped, tag = 'input window, operand 2, single buffered']
    #allocation10 [shape = 'u8[65536]{0}', space=vmem, size = 0x10000, scoped, tag = 'input window, operand 4, single buffered']
    #allocation11 [shape = 's32[1]{0}', space=sflag, size = 0x4, scoped, tag = 'scoped memory for tpu_custom_call.1']
    #allocation12 [shape = 'u8[512]{0}', space=vmem, size = 0x400, scoped, tag = 'input window, operand 5, single buffered']
    #allocation13 [shape = 'u8[512]{0}', space=vmem, size = 0x400, scoped, tag = 'input window, operand 6, single buffered']
    #allocation14 [shape = 's32[1]{0}', space=sflag, size = 0x4, scoped, tag = 'scoped memory for tpu_custom_call.1']
    #allocation15 [shape = 'u8[4096]{0}', space=vmem, size = 0x1000, scoped, tag = 'output window, operand 0, single buffered']
    %17 = vsyncpa [#allocation5], 0
    %18 = vsyncpa [#allocation8], 0
    %19 = vsyncpa [#allocation11], 0
    %20 = vsyncpa [#allocation14], 0
    %21 = vsyncpa [#allocation6], 0
    // Predicated region
    $region2: #{tpu_custom_call.1} parent=1 // pred_check
      _
    $region3: #{tpu_custom_call.1} parent=1 // pred_check_branch
      %23 = sbr.rel (0) target = $region5
    $region4: #{tpu_custom_call.1} parent=1 // pred_region
      %s25 = ssub.s32 2048, 2048
      %26 = vsyncadd [#allocation5], %s25
      %s27 = sshll.u32 [#allocation4], 4
      %s28 = int_to_ptr.vmem [resolvable:$true] %s27
      %33 = dma.hbm_to_vmem [thread:$0]  %s0, 2048, %s28, [#allocation5], 128, 128, 8
    $region5: #{tpu_custom_call.1} parent=1 // pred_fallthru
      _
    // Predicated region
    $region6: #{tpu_custom_call.1} parent=1 // pred_check
      _
    $region7: #{tpu_custom_call.1} parent=1 // pred_check_branch
      %35 = sbr.rel (0) target = $region9
    $region8: #{tpu_custom_call.1} parent=1 // pred_region
      %s37 = ssub.s32 128, 128
      %38 = vsyncadd [#allocation8], %s37
      %s39 = sshll.u32 [#allocation7], 4
      %s40 = int_to_ptr.vmem [resolvable:$true] %s39
      %45 = dma.hbm_to_vmem [thread:$0]  %s1, 128, %s40, [#allocation8], 16, 16, 1
    $region9: #{tpu_custom_call.1} parent=1 // pred_fallthru
      _
    // Predicated region
    $region10: #{tpu_custom_call.1} parent=1 // pred_check
      _
    $region11: #{tpu_custom_call.1} parent=1 // pred_check_branch
      %47 = sbr.rel (0) target = $region13
    $region12: #{tpu_custom_call.1} parent=1 // pred_region
      %s49 = ssub.s32 16, 16
      %50 = vsyncadd [#allocation8], %s49
      %s52 = sshll.u32 [#allocation9], 4
      %s53 = int_to_ptr.vmem [resolvable:$true] %s52
      %55 = dma.hbm_to_vmem [thread:$0]  %s2, 16, %s53, [#allocation8]
    $region13: #{tpu_custom_call.1} parent=1 // pred_fallthru
      _
    // Predicated region
    $region14: #{tpu_custom_call.1} parent=1 // pred_check
      _
    $region15: #{tpu_custom_call.1} parent=1 // pred_check_branch
      %57 = sbr.rel (0) target = $region17
    $region16: #{tpu_custom_call.1} parent=1 // pred_region
      _
    $region17: #{tpu_custom_call.1} parent=1 // pred_fallthru
      _
    // Predicated region
    $region18: #{tpu_custom_call.1} parent=1 // pred_check
      _
    $region19: #{tpu_custom_call.1} parent=1 // pred_check_branch
      %59 = sbr.rel (0) target = $region21
    $region20: #{tpu_custom_call.1} parent=1 // pred_region
      %s61 = ssub.s32 2048, 2048
      %62 = vsyncadd [#allocation11], %s61
      %s63 = sshll.u32 [#allocation10], 4
      %s64 = int_to_ptr.vmem [resolvable:$true] %s63
      %69 = dma.hbm_to_vmem [thread:$0]  %s4, 2048, %s64, [#allocation11], 128, 128, 8
    $region21: #{tpu_custom_call.1} parent=1 // pred_fallthru
      _
    // Predicated region
    $region22: #{tpu_custom_call.1} parent=1 // pred_check
      _
    $region23: #{tpu_custom_call.1} parent=1 // pred_check_branch
      %71 = sbr.rel (0) target = $region25
    $region24: #{tpu_custom_call.1} parent=1 // pred_region
      %s73 = ssub.s32 16, 16
      %74 = vsyncadd [#allocation11], %s73
      %s76 = sshll.u32 [#allocation12], 4
      %s77 = int_to_ptr.vmem [resolvable:$true] %s76
      %79 = dma.hbm_to_vmem [thread:$0]  %s5, 16, %s77, [#allocation11]
    $region25: #{tpu_custom_call.1} parent=1 // pred_fallthru
      _
    // Predicated region
    $region26: #{tpu_custom_call.1} parent=1 // pred_check
      _
    $region27: #{tpu_custom_call.1} parent=1 // pred_check_branch
      %81 = sbr.rel (0) target = $region29
    $region28: #{tpu_custom_call.1} parent=1 // pred_region
      %s83 = ssub.s32 16, 16
      %84 = vsyncadd [#allocation14], %s83
      %s86 = sshll.u32 [#allocation13], 4
      %s87 = int_to_ptr.vmem [resolvable:$true] %s86
      %89 = dma.hbm_to_vmem [thread:$0]  %s6, 16, %s87, [#allocation14]
    $region29: #{tpu_custom_call.1} parent=1 // pred_fallthru
      _
    // Predicated region
    $region30: #{tpu_custom_call.1} parent=1 // pred_check
      _
    $region31: #{tpu_custom_call.1} parent=1 // pred_check_branch
      %91 = sbr.rel (0) target = $region33
    $region32: #{tpu_custom_call.1} parent=1 // pred_region
      _
    $region33: #{tpu_custom_call.1} parent=1 // pred_fallthru
      _
    // Predicated region
    $region34: #{tpu_custom_call.1} parent=1 // pred_check
      _
    $region35: #{tpu_custom_call.1} parent=1 // pred_check_branch
      %93 = sbr.rel (0) target = $region37
    $region36: #{tpu_custom_call.1} parent=1 // pred_region
      %94 = dma.done [#allocation5], 2048
    $region37: #{tpu_custom_call.1} parent=1 // pred_fallthru
      _
    // Predicated region
    $region38: #{tpu_custom_call.1} parent=1 // pred_check
      _
    $region39: #{tpu_custom_call.1} parent=1 // pred_check_branch
      %96 = sbr.rel (0) target = $region41
    $region40: #{tpu_custom_call.1} parent=1 // pred_region
      %97 = dma.done [#allocation8], 128
    $region41: #{tpu_custom_call.1} parent=1 // pred_fallthru
      _
    // Predicated region
    $region42: #{tpu_custom_call.1} parent=1 // pred_check
      _
    $region43: #{tpu_custom_call.1} parent=1 // pred_check_branch
      %99 = sbr.rel (0) target = $region45
    $region44: #{tpu_custom_call.1} parent=1 // pred_region
      %100 = dma.done [#allocation8], 16
    $region45: #{tpu_custom_call.1} parent=1 // pred_fallthru
      _
    // Predicated region
    $region46: #{tpu_custom_call.1} parent=1 // pred_check
      _
    $region47: #{tpu_custom_call.1} parent=1 // pred_check_branch
      %102 = sbr.rel (0) target = $region49
    $region48: #{tpu_custom_call.1} parent=1 // pred_region
      %103 = dma.done [#allocation11], 2048
    $region49: #{tpu_custom_call.1} parent=1 // pred_fallthru
      _
    // Predicated region
    $region50: #{tpu_custom_call.1} parent=1 // pred_check
      _
    $region51: #{tpu_custom_call.1} parent=1 // pred_check_branch
      %105 = sbr.rel (0) target = $region53
    $region52: #{tpu_custom_call.1} parent=1 // pred_region
      %106 = dma.done [#allocation11], 16
    $region53: #{tpu_custom_call.1} parent=1 // pred_fallthru
      _
    // Predicated region
    $region54: #{tpu_custom_call.1} parent=1 // pred_check
      _
    $region55: #{tpu_custom_call.1} parent=1 // pred_check_branch
      %108 = sbr.rel (0) target = $region57
    $region56: #{tpu_custom_call.1} parent=1 // pred_region
      %109 = dma.done [#allocation14], 16
    $region57: #{tpu_custom_call.1} parent=1 // pred_fallthru
      _
    %v110 = vld [vmem:[#allocation4] sm:$0xff]
    %v111 = vld [vmem:[#allocation4 + $0x8] sm:$0xff]
    %v112 = vld [vmem:[#allocation4 + $0x10] sm:$0xff]
    %v113 = vld [vmem:[#allocation4 + $0x18] sm:$0xff]
    %v114 = vld [vmem:[#allocation4 + $0x20] sm:$0xff]
    %v115 = vld [vmem:[#allocation4 + $0x28] sm:$0xff]
    %v116 = vld [vmem:[#allocation4 + $0x30] sm:$0xff]
    %v117 = vld [vmem:[#allocation4 + $0x38] sm:$0xff]
    %v118 = vld [vmem:[#allocation4 + $0x40] sm:$0xff]
    %v119 = vld [vmem:[#allocation4 + $0x48] sm:$0xff]
    %v120 = vld [vmem:[#allocation4 + $0x50] sm:$0xff]
    %v121 = vld [vmem:[#allocation4 + $0x58] sm:$0xff]
    %v122 = vld [vmem:[#allocation4 + $0x60] sm:$0xff]
    %v123 = vld [vmem:[#allocation4 + $0x68] sm:$0xff]
    %v124 = vld [vmem:[#allocation4 + $0x70] sm:$0xff]
    %v125 = vld [vmem:[#allocation4 + $0x78] sm:$0xff]
    %v126 = vld [vmem:[#allocation7] sm:$0x1]
    %v127 = vld [vmem:[#allocation7 + $0x1] sm:$0x1]
    %v128 = vld [vmem:[#allocation7 + $0x2] sm:$0x1]
    %v129 = vld [vmem:[#allocation7 + $0x3] sm:$0x1]
    %v130 = vld [vmem:[#allocation7 + $0x4] sm:$0x1]
    %v131 = vld [vmem:[#allocation7 + $0x5] sm:$0x1]
    %v132 = vld [vmem:[#allocation7 + $0x6] sm:$0x1]
    %v133 = vld [vmem:[#allocation7 + $0x7] sm:$0x1]
    %v134 = vld [vmem:[#allocation9] sm:$0x1]
    %v136 = vlaneseq
    %v137 = vshrl.u32 %v136, 7
    %v138 = vsub.s32 0, %v137
    %v139 = vrot.slane %v134, %v138
    %v141 = vmul.f32 %v110, %v139
    %v142 = vmul.f32 %v111, %v139
    %v143 = vmul.f32 %v112, %v139
    %v144 = vmul.f32 %v113, %v139
    %v145 = vmul.f32 %v114, %v139
    %v146 = vmul.f32 %v115, %v139
    %v147 = vmul.f32 %v116, %v139
    %v148 = vmul.f32 %v117, %v139
    %v149 = vmul.f32 %v118, %v139
    %v150 = vmul.f32 %v119, %v139
    %v151 = vmul.f32 %v120, %v139
    %v152 = vmul.f32 %v121, %v139
    %v153 = vmul.f32 %v122, %v139
    %v154 = vmul.f32 %v123, %v139
    %v155 = vmul.f32 %v124, %v139
    %v156 = vmul.f32 %v125, %v139
    %157 = vadd.xlane.f32.xlu0 %v141
    %v158 = vpop.xlane.xlu0 %157
    %159 = vadd.xlane.f32.xlu0 %v142
    %v160 = vpop.xlane.xlu0 %159
    %161 = vadd.xlane.f32.xlu0 %v143
    %v162 = vpop.xlane.xlu0 %161
    %163 = vadd.xlane.f32.xlu0 %v144
    %v164 = vpop.xlane.xlu0 %163
    %165 = vadd.xlane.f32.xlu0 %v145
    %v166 = vpop.xlane.xlu0 %165
    %167 = vadd.xlane.f32.xlu0 %v146
    %v168 = vpop.xlane.xlu0 %167
    %169 = vadd.xlane.f32.xlu0 %v147
    %v170 = vpop.xlane.xlu0 %169
    %171 = vadd.xlane.f32.xlu0 %v148
    %v172 = vpop.xlane.xlu0 %171
    %173 = vadd.xlane.f32.xlu0 %v149
    %v174 = vpop.xlane.xlu0 %173
    %175 = vadd.xlane.f32.xlu0 %v150
    %v176 = vpop.xlane.xlu0 %175
    %177 = vadd.xlane.f32.xlu0 %v151
    %v178 = vpop.xlane.xlu0 %177
    %179 = vadd.xlane.f32.xlu0 %v152
    %v180 = vpop.xlane.xlu0 %179
    %181 = vadd.xlane.f32.xlu0 %v153
    %v182 = vpop.xlane.xlu0 %181
    %183 = vadd.xlane.f32.xlu0 %v154
    %v184 = vpop.xlane.xlu0 %183
    %185 = vadd.xlane.f32.xlu0 %v155
    %v186 = vpop.xlane.xlu0 %185
    %187 = vadd.xlane.f32.xlu0 %v156
    %v188 = vpop.xlane.xlu0 %187
    %v189 = vld [vmem:[#allocation2] sm:$0x1]
    %v191 = vlaneseq
    %v192 = vshrl.u32 %v191, 7
    %v193 = vsub.s32 0, %v192
    %v194 = vrot.slane %v189, %v193
    %v196 = vadd.f32 %v158, %v194
    %v197 = vadd.f32 %v160, %v194
    %v198 = vadd.f32 %v162, %v194
    %v199 = vadd.f32 %v164, %v194
    %v200 = vadd.f32 %v166, %v194
    %v201 = vadd.f32 %v168, %v194
    %v202 = vadd.f32 %v170, %v194
    %v203 = vadd.f32 %v172, %v194
    %v204 = vadd.f32 %v174, %v194
    %v205 = vadd.f32 %v176, %v194
    %v206 = vadd.f32 %v178, %v194
    %v207 = vadd.f32 %v180, %v194
    %v208 = vadd.f32 %v182, %v194
    %v209 = vadd.f32 %v184, %v194
    %v210 = vadd.f32 %v186, %v194
    %v211 = vadd.f32 %v188, %v194
    %v212 = vlaneseq
    %v213 = vshrl.u32 %v212, 7
    %v214 = vadd.s32 %v213, 8
    %v215 = vlaneseq
    %v216 = vshrl.u32 %v215, 7
    %v217 = vsub.s32 0, %v216
    %v218 = vrot.slane %v126, %v217
    %v219 = vlaneseq
    %v220 = vshrl.u32 %v219, 7
    %v221 = vsub.s32 0, %v220
    %v222 = vrot.slane %v127, %v221
    %v223 = vlaneseq
    %v224 = vshrl.u32 %v223, 7
    %v225 = vsub.s32 0, %v224
    %v226 = vrot.slane %v128, %v225
    %v227 = vlaneseq
    %v228 = vshrl.u32 %v227, 7
    %v229 = vsub.s32 0, %v228
    %v230 = vrot.slane %v129, %v229
    %v231 = vlaneseq
    %v232 = vshrl.u32 %v231, 7
    %v233 = vsub.s32 0, %v232
    %v234 = vrot.slane %v130, %v233
    %v235 = vlaneseq
    %v236 = vshrl.u32 %v235, 7
    %v237 = vsub.s32 0, %v236
    %v238 = vrot.slane %v131, %v237
    %v239 = vlaneseq
    %v240 = vshrl.u32 %v239, 7
    %v241 = vsub.s32 0, %v240
    %v242 = vrot.slane %v132, %v241
    %v243 = vlaneseq
    %v244 = vshrl.u32 %v243, 7
    %v245 = vsub.s32 0, %v244
    %v246 = vrot.slane %v133, %v245
    %vm247 = vcmp.lt.s32.totalorder %v213, %v218
    %vm248 = vcmp.lt.s32.totalorder %v214, %v218
    %vm249 = vcmp.lt.s32.totalorder %v213, %v222
    %vm250 = vcmp.lt.s32.totalorder %v214, %v222
    %vm251 = vcmp.lt.s32.totalorder %v213, %v226
    %vm252 = vcmp.lt.s32.totalorder %v214, %v226
    %vm253 = vcmp.lt.s32.totalorder %v213, %v230
    %vm254 = vcmp.lt.s32.totalorder %v214, %v230
    %vm255 = vcmp.lt.s32.totalorder %v213, %v234
    %vm256 = vcmp.lt.s32.totalorder %v214, %v234
    %vm257 = vcmp.lt.s32.totalorder %v213, %v238
    %vm258 = vcmp.lt.s32.totalorder %v214, %v238
    %vm259 = vcmp.lt.s32.totalorder %v213, %v242
    %vm260 = vcmp.lt.s32.totalorder %v214, %v242
    %vm261 = vcmp.lt.s32.totalorder %v213, %v246
    %vm262 = vcmp.lt.s32.totalorder %v214, %v246
    %v263 = vsel %vm247, %v196, -inf
    %v264 = vsel %vm248, %v197, -inf
    %v265 = vsel %vm249, %v198, -inf
    %v266 = vsel %vm250, %v199, -inf
    %v267 = vsel %vm251, %v200, -inf
    %v268 = vsel %vm252, %v201, -inf
    %v269 = vsel %vm253, %v202, -inf
    %v270 = vsel %vm254, %v203, -inf
    %v271 = vsel %vm255, %v204, -inf
    %v272 = vsel %vm256, %v205, -inf
    %v273 = vsel %vm257, %v206, -inf
    %v274 = vsel %vm258, %v207, -inf
    %v275 = vsel %vm259, %v208, -inf
    %v276 = vsel %vm260, %v209, -inf
    %v277 = vsel %vm261, %v210, -inf
    %v278 = vsel %vm262, %v211, -inf
    %vm279 = vcmask 7168
    %v280 = vsel %vm279, %v263, -inf
    %v281 = vsel %vm279, %v264, -inf
    %v282 = vmax.f32 %v280, %v281
    %v283 = vrot.slane %v282, 4
    %v284 = vmax.f32 %v282, %v283
    %v285 = vrot.slane %v284, 2
    %v286 = vmax.f32 %v284, %v285
    %v287 = vrot.slane %v286, 1
    %v288 = vmax.f32 %v286, %v287
    %v289 = vsel %vm279, %v265, -inf
    %v290 = vsel %vm279, %v266, -inf
    %v291 = vmax.f32 %v289, %v290
    %v292 = vrot.slane %v291, 4
    %v293 = vmax.f32 %v291, %v292
    %v294 = vrot.slane %v293, 2
    %v295 = vmax.f32 %v293, %v294
    %v296 = vrot.slane %v295, 1
    %v297 = vmax.f32 %v295, %v296
    %v298 = vsel %vm279, %v267, -inf
    %v299 = vsel %vm279, %v268, -inf
    %v300 = vmax.f32 %v298, %v299
    %v301 = vrot.slane %v300, 4
    %v302 = vmax.f32 %v300, %v301
    %v303 = vrot.slane %v302, 2
    %v304 = vmax.f32 %v302, %v303
    %v305 = vrot.slane %v304, 1
    %v306 = vmax.f32 %v304, %v305
    %v307 = vsel %vm279, %v269, -inf
    %v308 = vsel %vm279, %v270, -inf
    %v309 = vmax.f32 %v307, %v308
    %v310 = vrot.slane %v309, 4
    %v311 = vmax.f32 %v309, %v310
    %v312 = vrot.slane %v311, 2
    %v313 = vmax.f32 %v311, %v312
    %v314 = vrot.slane %v313, 1
    %v315 = vmax.f32 %v313, %v314
    %v316 = vsel %vm279, %v271, -inf
    %v317 = vsel %vm279, %v272, -inf
    %v318 = vmax.f32 %v316, %v317
    %v319 = vrot.slane %v318, 4
    %v320 = vmax.f32 %v318, %v319
    %v321 = vrot.slane %v320, 2
    %v322 = vmax.f32 %v320, %v321
    %v323 = vrot.slane %v322, 1
    %v324 = vmax.f32 %v322, %v323
    %v325 = vsel %vm279, %v273, -inf
    %v326 = vsel %vm279, %v274, -inf
    %v327 = vmax.f32 %v325, %v326
    %v328 = vrot.slane %v327, 4
    %v329 = vmax.f32 %v327, %v328
    %v330 = vrot.slane %v329, 2
    %v331 = vmax.f32 %v329, %v330
    %v332 = vrot.slane %v331, 1
    %v333 = vmax.f32 %v331, %v332
    %v334 = vsel %vm279, %v275, -inf
    %v335 = vsel %vm279, %v276, -inf
    %v336 = vmax.f32 %v334, %v335
    %v337 = vrot.slane %v336, 4
    %v338 = vmax.f32 %v336, %v337
    %v339 = vrot.slane %v338, 2
    %v340 = vmax.f32 %v338, %v339
    %v341 = vrot.slane %v340, 1
    %v342 = vmax.f32 %v340, %v341
    %v343 = vsel %vm279, %v277, -inf
    %v344 = vsel %vm279, %v278, -inf
    %v345 = vmax.f32 %v343, %v344
    %v346 = vrot.slane %v345, 4
    %v347 = vmax.f32 %v345, %v346
    %v348 = vrot.slane %v347, 2
    %v349 = vmax.f32 %v347, %v348
    %v350 = vrot.slane %v349, 1
    %v351 = vmax.f32 %v349, %v350
    %v352 = vsub.f32 %v263, %v288
    %v353 = vsub.f32 %v264, %v288
    %v354 = vsub.f32 %v265, %v297
    %v355 = vsub.f32 %v266, %v297
    %v356 = vsub.f32 %v267, %v306
    %v357 = vsub.f32 %v268, %v306
    %v358 = vsub.f32 %v269, %v315
    %v359 = vsub.f32 %v270, %v315
    %v360 = vsub.f32 %v271, %v324
    %v361 = vsub.f32 %v272, %v324
    %v362 = vsub.f32 %v273, %v333
    %v363 = vsub.f32 %v274, %v333
    %v364 = vsub.f32 %v275, %v342
    %v365 = vsub.f32 %v276, %v342
    %v366 = vsub.f32 %v277, %v351
    %v367 = vsub.f32 %v278, %v351
    %v368 = vmul.f32 %v352, 1.442695
    %v369 = vpow.pop %v368
    %v370 = vmul.f32 %v353, 1.442695
    %v371 = vpow.pop %v370
    %v372 = vmul.f32 %v354, 1.442695
    %v373 = vpow.pop %v372
    %v374 = vmul.f32 %v355, 1.442695
    %v375 = vpow.pop %v374
    %v376 = vmul.f32 %v356, 1.442695
    %v377 = vpow.pop %v376
    %v378 = vmul.f32 %v357, 1.442695
    %v379 = vpow.pop %v378
    %v380 = vmul.f32 %v358, 1.442695
    %v381 = vpow.pop %v380
    %v382 = vmul.f32 %v359, 1.442695
    %v383 = vpow.pop %v382
    %v384 = vmul.f32 %v360, 1.442695
    %v385 = vpow.pop %v384
    %v386 = vmul.f32 %v361, 1.442695
    %v387 = vpow.pop %v386
    %v388 = vmul.f32 %v362, 1.442695
    %v389 = vpow.pop %v388
    %v390 = vmul.f32 %v363, 1.442695
    %v391 = vpow.pop %v390
    %v392 = vmul.f32 %v364, 1.442695
    %v393 = vpow.pop %v392
    %v394 = vmul.f32 %v365, 1.442695
    %v395 = vpow.pop %v394
    %v396 = vmul.f32 %v366, 1.442695
    %v397 = vpow.pop %v396
    %v398 = vmul.f32 %v367, 1.442695
    %v399 = vpow.pop %v398
    %v400 = vsel %vm279, %v369, 0.0
    %v401 = vsel %vm279, %v371, 0.0
    %v402 = vadd.f32 %v400, %v401
    %v403 = vrot.slane %v402, 4
    %v404 = vadd.f32 %v402, %v403
    %v405 = vrot.slane %v404, 2
    %v406 = vadd.f32 %v404, %v405
    %v407 = vrot.slane %v406, 1
    %v408 = vadd.f32 %v406, %v407
    %v409 = vsel %vm279, %v373, 0.0
    %v410 = vsel %vm279, %v375, 0.0
    %v411 = vadd.f32 %v409, %v410
    %v412 = vrot.slane %v411, 4
    %v413 = vadd.f32 %v411, %v412
    %v414 = vrot.slane %v413, 2
    %v415 = vadd.f32 %v413, %v414
    %v416 = vrot.slane %v415, 1
    %v417 = vadd.f32 %v415, %v416
    %v418 = vsel %vm279, %v377, 0.0
    %v419 = vsel %vm279, %v379, 0.0
    %v420 = vadd.f32 %v418, %v419
    %v421 = vrot.slane %v420, 4
    %v422 = vadd.f32 %v420, %v421
    %v423 = vrot.slane %v422, 2
    %v424 = vadd.f32 %v422, %v423
    %v425 = vrot.slane %v424, 1
    %v426 = vadd.f32 %v424, %v425
    %v427 = vsel %vm279, %v381, 0.0
    %v428 = vsel %vm279, %v383, 0.0
    %v429 = vadd.f32 %v427, %v428
    %v430 = vrot.slane %v429, 4
    %v431 = vadd.f32 %v429, %v430
    %v432 = vrot.slane %v431, 2
    %v433 = vadd.f32 %v431, %v432
    %v434 = vrot.slane %v433, 1
    %v435 = vadd.f32 %v433, %v434
    %v436 = vsel %vm279, %v385, 0.0
    %v437 = vsel %vm279, %v387, 0.0
    %v438 = vadd.f32 %v436, %v437
    %v439 = vrot.slane %v438, 4
    %v440 = vadd.f32 %v438, %v439
    %v441 = vrot.slane %v440, 2
    %v442 = vadd.f32 %v440, %v441
    %v443 = vrot.slane %v442, 1
    %v444 = vadd.f32 %v442, %v443
    %v445 = vsel %vm279, %v389, 0.0
    %v446 = vsel %vm279, %v391, 0.0
    %v447 = vadd.f32 %v445, %v446
    %v448 = vrot.slane %v447, 4
    %v449 = vadd.f32 %v447, %v448
    %v450 = vrot.slane %v449, 2
    %v451 = vadd.f32 %v449, %v450
    %v452 = vrot.slane %v451, 1
    %v453 = vadd.f32 %v451, %v452
    %v454 = vsel %vm279, %v393, 0.0
    %v455 = vsel %vm279, %v395, 0.0
    %v456 = vadd.f32 %v454, %v455
    %v457 = vrot.slane %v456, 4
    %v458 = vadd.f32 %v456, %v457
    %v459 = vrot.slane %v458, 2
    %v460 = vadd.f32 %v458, %v459
    %v461 = vrot.slane %v460, 1
    %v462 = vadd.f32 %v460, %v461
    %v463 = vsel %vm279, %v397, 0.0
    %v464 = vsel %vm279, %v399, 0.0
    %v465 = vadd.f32 %v463, %v464
    %v466 = vrot.slane %v465, 4
    %v467 = vadd.f32 %v465, %v466
    %v468 = vrot.slane %v467, 2
    %v469 = vadd.f32 %v467, %v468
    %v470 = vrot.slane %v469, 1
    %v471 = vadd.f32 %v469, %v470
    %473 = vset.pattern.permute.xlu0 0
    %474 = vperm.xlu0 %473, %v369
    %v475 = vpop.permute.xlu0 %474
    %478 = vset.pattern.permute.xlu0 0
    %479 = vperm.xlu0 %478, %v371
    %v480 = vpop.permute.xlu0 %479
    %483 = vset.pattern.permute.xlu0 0
    %484 = vperm.xlu0 %483, %v373
    %v485 = vpop.permute.xlu0 %484
    %488 = vset.pattern.permute.xlu0 0
    %489 = vperm.xlu0 %488, %v375
    %v490 = vpop.permute.xlu0 %489
    %493 = vset.pattern.permute.xlu0 0
    %494 = vperm.xlu0 %493, %v377
    %v495 = vpop.permute.xlu0 %494
    %498 = vset.pattern.permute.xlu0 0
    %499 = vperm.xlu0 %498, %v379
    %v500 = vpop.permute.xlu0 %499
    %503 = vset.pattern.permute.xlu0 0
    %504 = vperm.xlu0 %503, %v381
    %v505 = vpop.permute.xlu0 %504
    %508 = vset.pattern.permute.xlu0 0
    %509 = vperm.xlu0 %508, %v383
    %v510 = vpop.permute.xlu0 %509
    %513 = vset.pattern.permute.xlu0 0
    %514 = vperm.xlu0 %513, %v385
    %v515 = vpop.permute.xlu0 %514
    %518 = vset.pattern.permute.xlu0 0
    %519 = vperm.xlu0 %518, %v387
    %v520 = vpop.permute.xlu0 %519
    %523 = vset.pattern.permute.xlu0 0
    %524 = vperm.xlu0 %523, %v389
    %v525 = vpop.permute.xlu0 %524
    %528 = vset.pattern.permute.xlu0 0
    %529 = vperm.xlu0 %528, %v391
    %v530 = vpop.permute.xlu0 %529
    %533 = vset.pattern.permute.xlu0 0
    %534 = vperm.xlu0 %533, %v393
    %v535 = vpop.permute.xlu0 %534
    %538 = vset.pattern.permute.xlu0 0
    %539 = vperm.xlu0 %538, %v395
    %v540 = vpop.permute.xlu0 %539
    %543 = vset.pattern.permute.xlu0 0
    %544 = vperm.xlu0 %543, %v397
    %v545 = vpop.permute.xlu0 %544
    %548 = vset.pattern.permute.xlu0 0
    %549 = vperm.xlu0 %548, %v399
    %v550 = vpop.permute.xlu0 %549
    %v552 = vmul.f32 %v475, %v110
    %v553 = vmul.f32 %v480, %v111
    %v554 = vmul.f32 %v485, %v112
    %v555 = vmul.f32 %v490, %v113
    %v556 = vmul.f32 %v495, %v114
    %v557 = vmul.f32 %v500, %v115
    %v558 = vmul.f32 %v505, %v116
    %v559 = vmul.f32 %v510, %v117
    %v560 = vmul.f32 %v515, %v118
    %v561 = vmul.f32 %v520, %v119
    %v562 = vmul.f32 %v525, %v120
    %v563 = vmul.f32 %v530, %v121
    %v564 = vmul.f32 %v535, %v122
    %v565 = vmul.f32 %v540, %v123
    %v566 = vmul.f32 %v545, %v124
    %v567 = vmul.f32 %v550, %v125
    %v568 = vadd.f32 %v552, %v553
    %v569 = vrot.slane %v568, 4
    %v570 = vadd.f32 %v568, %v569
    %v571 = vrot.slane %v570, 2
    %v572 = vadd.f32 %v570, %v571
    %v573 = vrot.slane %v572, 1
    %v574 = vadd.f32 %v572, %v573
    %v575 = vadd.f32 %v554, %v555
    %v576 = vrot.slane %v575, 4
    %v577 = vadd.f32 %v575, %v576
    %v578 = vrot.slane %v577, 2
    %v579 = vadd.f32 %v577, %v578
    %v580 = vrot.slane %v579, 1
    %v581 = vadd.f32 %v579, %v580
    %v582 = vadd.f32 %v556, %v557
    %v583 = vrot.slane %v582, 4
    %v584 = vadd.f32 %v582, %v583
    %v585 = vrot.slane %v584, 2
    %v586 = vadd.f32 %v584, %v585
    %v587 = vrot.slane %v586, 1
    %v588 = vadd.f32 %v586, %v587
    %v589 = vadd.f32 %v558, %v559
    %v590 = vrot.slane %v589, 4
    %v591 = vadd.f32 %v589, %v590
    %v592 = vrot.slane %v591, 2
    %v593 = vadd.f32 %v591, %v592
    %v594 = vrot.slane %v593, 1
    %v595 = vadd.f32 %v593, %v594
    %v596 = vadd.f32 %v560, %v561
    %v597 = vrot.slane %v596, 4
    %v598 = vadd.f32 %v596, %v597
    %v599 = vrot.slane %v598, 2
    %v600 = vadd.f32 %v598, %v599
    %v601 = vrot.slane %v600, 1
    %v602 = vadd.f32 %v600, %v601
    %v603 = vadd.f32 %v562, %v563
    %v604 = vrot.slane %v603, 4
    %v605 = vadd.f32 %v603, %v604
    %v606 = vrot.slane %v605, 2
    %v607 = vadd.f32 %v605, %v606
    %v608 = vrot.slane %v607, 1
    %v609 = vadd.f32 %v607, %v608
    %v610 = vadd.f32 %v564, %v565
    %v611 = vrot.slane %v610, 4
    %v612 = vadd.f32 %v610, %v611
    %v613 = vrot.slane %v612, 2
    %v614 = vadd.f32 %v612, %v613
    %v615 = vrot.slane %v614, 1
    %v616 = vadd.f32 %v614, %v615
    %v617 = vadd.f32 %v566, %v567
    %v618 = vrot.slane %v617, 4
    %v619 = vadd.f32 %v617, %v618
    %v620 = vrot.slane %v619, 2
    %v621 = vadd.f32 %v619, %v620
    %v622 = vrot.slane %v621, 1
    %v623 = vadd.f32 %v621, %v622
    %v624 = vrcp.pop %v408
    %v625 = vrcp.pop %v417
    %v626 = vrcp.pop %v426
    %v627 = vrcp.pop %v435
    %v628 = vrcp.pop %v444
    %v629 = vrcp.pop %v453
    %v630 = vrcp.pop %v462
    %v631 = vrcp.pop %v471
    %633 = vset.pattern.permute.xlu0 0
    %634 = vperm.xlu0 %633, %v624
    %v635 = vpop.permute.xlu0 %634
    %638 = vset.pattern.permute.xlu0 0
    %639 = vperm.xlu0 %638, %v625
    %v640 = vpop.permute.xlu0 %639
    %643 = vset.pattern.permute.xlu0 0
    %644 = vperm.xlu0 %643, %v626
    %v645 = vpop.permute.xlu0 %644
    %648 = vset.pattern.permute.xlu0 0
    %649 = vperm.xlu0 %648, %v627
    %v650 = vpop.permute.xlu0 %649
    %653 = vset.pattern.permute.xlu0 0
    %654 = vperm.xlu0 %653, %v628
    %v655 = vpop.permute.xlu0 %654
    %658 = vset.pattern.permute.xlu0 0
    %659 = vperm.xlu0 %658, %v629
    %v660 = vpop.permute.xlu0 %659
    %663 = vset.pattern.permute.xlu0 0
    %664 = vperm.xlu0 %663, %v630
    %v665 = vpop.permute.xlu0 %664
    %668 = vset.pattern.permute.xlu0 0
    %669 = vperm.xlu0 %668, %v631
    %v670 = vpop.permute.xlu0 %669
    %v672 = vmul.f32 %v574, %v635
    %v673 = vmul.f32 %v581, %v640
    %v674 = vmul.f32 %v588, %v645
    %v675 = vmul.f32 %v595, %v650
    %v676 = vmul.f32 %v602, %v655
    %v677 = vmul.f32 %v609, %v660
    %v678 = vmul.f32 %v616, %v665
    %v679 = vmul.f32 %v623, %v670
    %v680 = vld [vmem:[#allocation10] sm:$0xff]
    %v681 = vld [vmem:[#allocation10 + $0x8] sm:$0xff]
    %v682 = vld [vmem:[#allocation10 + $0x10] sm:$0xff]
    %v683 = vld [vmem:[#allocation10 + $0x18] sm:$0xff]
    %v684 = vld [vmem:[#allocation10 + $0x20] sm:$0xff]
    %v685 = vld [vmem:[#allocation10 + $0x28] sm:$0xff]
    %v686 = vld [vmem:[#allocation10 + $0x30] sm:$0xff]
    %v687 = vld [vmem:[#allocation10 + $0x38] sm:$0xff]
    %v688 = vld [vmem:[#allocation10 + $0x40] sm:$0xff]
    %v689 = vld [vmem:[#allocation10 + $0x48] sm:$0xff]
    %v690 = vld [vmem:[#allocation10 + $0x50] sm:$0xff]
    %v691 = vld [vmem:[#allocation10 + $0x58] sm:$0xff]
    %v692 = vld [vmem:[#allocation10 + $0x60] sm:$0xff]
    %v693 = vld [vmem:[#allocation10 + $0x68] sm:$0xff]
    %v694 = vld [vmem:[#allocation10 + $0x70] sm:$0xff]
    %v695 = vld [vmem:[#allocation10 + $0x78] sm:$0xff]
    %v696 = vld [vmem:[#allocation12] sm:$0x1]
    %v698 = vlaneseq
    %v699 = vshrl.u32 %v698, 7
    %v700 = vsub.s32 0, %v699
    %v701 = vrot.slane %v696, %v700
    %vm711 = vcmask 1041409
    %v712 = vsel %vm711, %v673, %v672
    %vm713 = vcmask 1042434
    %v714 = vsel %vm713, %v674, %v712
    %vm715 = vcmask 1043459
    %v716 = vsel %vm715, %v675, %v714
    %vm717 = vcmask 1044484
    %v718 = vsel %vm717, %v676, %v716
    %vm719 = vcmask 1045509
    %v720 = vsel %vm719, %v677, %v718
    %vm721 = vcmask 1046534
    %v722 = vsel %vm721, %v678, %v720
    %vm723 = vcmask 1047559
    %v724 = vsel %vm723, %v679, %v722
    %726 = vmatprep.subr.mxu0 0.0
    %727 = vmatpush1.msra.mxu0 %v680
    %728 = vmatprep.subr.mxu0 0.0
    %729 = vmatpush1.msra.mxu0 %v681
    %730 = vmatprep.subr.mxu0 0.0
    %731 = vmatpush1.msra.mxu0 %v682
    %732 = vmatprep.subr.mxu0 0.0
    %733 = vmatpush1.msra.mxu0 %v683
    %734 = vmatprep.subr.mxu0 0.0
    %735 = vmatpush1.msra.mxu0 %v684
    %736 = vmatprep.subr.mxu0 0.0
    %737 = vmatpush1.msra.mxu0 %v685
    %738 = vmatprep.subr.mxu0 0.0
    %739 = vmatpush1.msra.mxu0 %v686
    %740 = vmatprep.subr.mxu0 0.0
    %741 = vmatpush1.msra.mxu0 %v687
    %742 = vmatprep.subr.mxu0 0.0
    %743 = vmatpush1.msra.mxu0 %v688
    %744 = vmatprep.subr.mxu0 0.0
    %745 = vmatpush1.msra.mxu0 %v689
    %746 = vmatprep.subr.mxu0 0.0
    %747 = vmatpush1.msra.mxu0 %v690
    %748 = vmatprep.subr.mxu0 0.0
    %749 = vmatpush1.msra.mxu0 %v691
    %750 = vmatprep.subr.mxu0 0.0
    %751 = vmatpush1.msra.mxu0 %v692
    %752 = vmatprep.subr.mxu0 0.0
    %753 = vmatpush1.msra.mxu0 %v693
    %754 = vmatprep.subr.mxu0 0.0
    %755 = vmatpush1.msra.mxu0 %v694
    %756 = vmatprep.subr.mxu0 0.0
    %757 = vmatpush1.msra.mxu0 %v695
    %758 = vmatprep.subr.mxu0 0.0
    %759 = vmatpush1.msra.mxu0 0.0
    %760 = vmatprep.subr.mxu0 0.0
    %761 = vmatpush1.msra.mxu0 0.0
    %762 = vmatprep.subr.mxu0 0.0
    %763 = vmatpush1.msra.mxu0 0.0
    %764 = vmatprep.subr.mxu0 0.0
    %765 = vmatpush1.msra.mxu0 0.0
    %766 = vmatprep.subr.mxu0 0.0
    %767 = vmatpush1.msra.mxu0 0.0
    %768 = vmatprep.subr.mxu0 0.0
    %769 = vmatpush1.msra.mxu0 0.0
    %770 = vmatprep.subr.mxu0 0.0
    %771 = vmatpush1.msra.mxu0 0.0
    %772 = vmatprep.subr.mxu0 0.0
    %773 = vmatpush1.msra.mxu0 0.0
    %774 = vmatprep.subr.mxu0 0.0
    %775 = vmatpush1.msra.mxu0 0.0
    %776 = vmatprep.subr.mxu0 0.0
    %777 = vmatpush1.msra.mxu0 0.0
    %778 = vmatprep.subr.mxu0 0.0
    %779 = vmatpush1.msra.mxu0 0.0
    %780 = vmatprep.subr.mxu0 0.0
    %781 = vmatpush1.msra.mxu0 0.0
    %782 = vmatprep.subr.mxu0 0.0
    %783 = vmatpush1.msra.mxu0 0.0
    %784 = vmatprep.subr.mxu0 0.0
    %785 = vmatpush1.msra.mxu0 0.0
    %786 = vmatprep.subr.mxu0 0.0
    %787 = vmatpush1.msra.mxu0 0.0
    %788 = vmatprep.subr.mxu0 0.0
    %789 = vmatpush1.msra.mxu0 0.0
    %790 = vmatprep.mubr.f32.mxu0 0.0
    %791 = vmatmul.mubr.f32.gmra.mrb[0].mxu0 %v724
    %v792 = vpop.f32.mrb[0].mxu0
    %v793 = vadd.f32 %v701, %v792
    %v794 = vpop.f32.mrb[0].mxu0
    %795 = vdwg.mxu0
    %v796 = vmax.f32 %v793, 0.0
    %v797 = vld [vmem:[#allocation13] sm:$0x1]
    %v799 = vlaneseq
    %v800 = vshrl.u32 %v799, 7
    %v801 = vsub.s32 0, %v800
    %v802 = vrot.slane %v797, %v801
    %v804 = vmul.f32 %v796, %v802
    %805 = vadd.xlane.f32.xlu0 %v804
    %v806 = vpop.xlane.xlu0 %805
    %v807 = vld [vmem:[#allocation3] sm:$0x1]
    %v809 = vlaneseq
    %v810 = vshrl.u32 %v809, 7
    %v811 = vsub.s32 0, %v810
    %v812 = vrot.slane %v807, %v811
    %v814 = vadd.f32 %v806, %v812
    %v816 = vcombine.high %v814, %v814
    %v818 = vunpack.c.l.s4 1966171168
    %v819 = vunpack.c.0.s8 %v818
    %v820 = vlaneseq
    %v821 = vshrl.u32 %v820, 7
    %v822 = vsub.s32 %v819, %v821
    %v823 = vrot.slane %v814, %v822
    %v825 = vunpack.c.l.s4 1966171168
    %v826 = vunpack.c.0.s8 %v825
    %v827 = vlaneseq
    %v828 = vshrl.u32 %v827, 7
    %v829 = vsub.s32 %v826, %v828
    %v830 = vrot.slane %v816, %v829
    %v831 = vcombine.high %v823, %v823
    %v832 = vcombine.high %v830, %v830
    %v834 = vunpack.c.l.s4 1966171168
    %v835 = vunpack.c.0.s8 %v834
    %v836 = vlaneseq
    %v837 = vshrl.u32 %v836, 7
    %v838 = vsub.s32 %v835, %v837
    %v839 = vrot.slane %v823, %v838
    %v841 = vunpack.c.l.s4 1966171168
    %v842 = vunpack.c.0.s8 %v841
    %v843 = vlaneseq
    %v844 = vshrl.u32 %v843, 7
    %v845 = vsub.s32 %v842, %v844
    %v846 = vrot.slane %v830, %v845
    %v848 = vunpack.c.l.s4 1966171168
    %v849 = vunpack.c.0.s8 %v848
    %v850 = vlaneseq
    %v851 = vshrl.u32 %v850, 7
    %v852 = vsub.s32 %v849, %v851
    %v853 = vrot.slane %v831, %v852
    %v855 = vunpack.c.l.s4 1966171168
    %v856 = vunpack.c.0.s8 %v855
    %v857 = vlaneseq
    %v858 = vshrl.u32 %v857, 7
    %v859 = vsub.s32 %v856, %v858
    %v860 = vrot.slane %v832, %v859
    %v861 = vcombine.high %v839, %v839
    %v862 = vcombine.high %v846, %v846
    %v863 = vcombine.high %v853, %v853
    %v864 = vcombine.high %v860, %v860
    %vm873 = vcmask 0
    %874 = vst.msk [vmem:[#allocation15] sm:$0x1] %vm873, %v839
    %875 = vst.msk [vmem:[#allocation15 + $0x1] sm:$0x1] %vm873, %v853
    %876 = vst.msk [vmem:[#allocation15 + $0x2] sm:$0x1] %vm873, %v861
    %877 = vst.msk [vmem:[#allocation15 + $0x3] sm:$0x1] %vm873, %v863
    %878 = vst.msk [vmem:[#allocation15 + $0x4] sm:$0x1] %vm873, %v846
    %879 = vst.msk [vmem:[#allocation15 + $0x5] sm:$0x1] %vm873, %v860
    %880 = vst.msk [vmem:[#allocation15 + $0x6] sm:$0x1] %vm873, %v862
    %881 = vst.msk [vmem:[#allocation15 + $0x7] sm:$0x1] %vm873, %v864
    // Predicated region
    $region58: #{tpu_custom_call.1} parent=1 // pred_check
      _
    $region59: #{tpu_custom_call.1} parent=1 // pred_check_branch
      %883 = sbr.rel (0) target = $region61
    $region60: #{tpu_custom_call.1} parent=1 // pred_region
      %s885 = ssub.s32 128, 128
      %886 = vsyncadd [#allocation6], %s885
      %s887 = sshll.u32 [#allocation15], 4
      %s888 = int_to_ptr.vmem [resolvable:$true] %s887
      %893 = dma.vmem_to_hbm [thread:$0]  %s888, 128, %s8, [#allocation6], 16, 16, 1
    $region61: #{tpu_custom_call.1} parent=1 // pred_fallthru
      _
    // Predicated region
    $region62: #{tpu_custom_call.1} parent=1 // pred_check
      _
    $region63: #{tpu_custom_call.1} parent=1 // pred_check_branch
      %895 = sbr.rel (0) target = $region65
    $region64: #{tpu_custom_call.1} parent=1 // pred_region
      %896 = dma.done [#allocation6], 128
    $region65: #{tpu_custom_call.1} parent=1 // pred_fallthru
      _
    %897 = vsyncpa [#allocation5], 1
    %898 = vsyncpa [#allocation8], 1
    %899 = vsyncpa [#allocation11], 1
    %900 = vsyncpa [#allocation14], 1
    %901 = vsyncpa [#allocation6], 1

// kernel: tpu_custom_call.1
$region0: #{tpu_custom_call.1}
  #allocation0 [shape = 'u32[]', space=smem, size = 0x4, offset = 0x4, fixed_abs, tag = 'smem constant byte address 0x4 - core index']
  #allocation1 [shape = 'u32[144,128]{1,0:T(1,128)}', space=vmem, size = 0x12000, scoped, tag = 'internal scratch']
  #allocation2 [shape = 'f32[1,1]{1,0:T(1,128)S(1)}', space=vmem, size = 0x200, scoped, tag = 'scoped memory for tpu_custom_call.1']
  #allocation3 [shape = 'f32[1,1]{1,0:T(1,128)S(1)}', space=vmem, size = 0x200, scoped, tag = 'scoped memory for tpu_custom_call.1']
  %s0 = inlined_call_operand.hbm [shape: f32[8,16,128], index: 0, kind: input, shape index: {}]
  %s1 = inlined_call_operand.hbm [shape: s32[8,1,1], index: 1, kind: input, shape index: {}]
  %s2 = inlined_call_operand.hbm [shape: f32[1,128], index: 2, kind: input, shape index: {}]
  %s3 = inlined_call_operand.<no memory space> [shape: f32[1,1], index: 3, kind: input, shape index: {}]
  %s4 = inlined_call_operand.hbm [shape: f32[128,128], index: 4, kind: input, shape index: {}]
  %s5 = inlined_call_operand.hbm [shape: f32[1,128], index: 5, kind: input, shape index: {}]
  %s6 = inlined_call_operand.hbm [shape: f32[1,128], index: 6, kind: input, shape index: {}]
  %s7 = inlined_call_operand.<no memory space> [shape: f32[1,1], index: 7, kind: input, shape index: {}]
  %s8 = inlined_call_operand.hbm [shape: f32[8,1,1], index: 8, kind: output, shape index: {}]
  %s9 = sld [smem:[#allocation0]]
  $region66: #{tpu_custom_call.1} parent=0
    _
  %s11 = ssub.s32 1, %s9
  %s12 = scalar_select 0, %s11, %s9
  %v13 = vstv %s3
  %14 = vst [vmem:[#allocation2] sm:$0x1] %v13
  %v15 = vstv %s7
  %16 = vst [vmem:[#allocation3] sm:$0x1] %v15
  $region1: #{tpu_custom_call.1} parent=0
    #allocation4 [shape = 'u8[65536]{0}', space=vmem, size = 0x10000, scoped, tag = 'input window, operand 0, single buffered']
    #allocation5 [shape = 's32[1]{0}', space=sflag, size = 0x4, scoped, tag = 'scoped memory for tpu_custom_call.1']
    #allocation6 [shape = 's32[1]{0}', space=sflag, size = 0x4, scoped, tag = 'scoped memory for tpu_custom_call.1']
    #allocation7 [shape = 'u8[4096]{0}', space=vmem, size = 0x1000, scoped, tag = 'input window, operand 1, single buffered']
    #allocation8 [shape = 's32[1]{0}', space=sflag, size = 0x4, scoped, tag = 'scoped memory for tpu_custom_call.1']
    #allocation9 [shape = 'u8[512]{0}', space=vmem, size = 0x400, scoped, tag = 'input window, operand 2, single buffered']
    #allocation10 [shape = 'u8[65536]{0}', space=vmem, size = 0x10000, scoped, tag = 'input window, operand 4, single buffered']
    #allocation11 [shape = 's32[1]{0}', space=sflag, size = 0x4, scoped, tag = 'scoped memory for tpu_custom_call.1']
    #allocation12 [shape = 'u8[512]{0}', space=vmem, size = 0x400, scoped, tag = 'input window, operand 5, single buffered']
    #allocation13 [shape = 'u8[512]{0}', space=vmem, size = 0x400, scoped, tag = 'input window, operand 6, single buffered']
    #allocation14 [shape = 's32[1]{0}', space=sflag, size = 0x4, scoped, tag = 'scoped memory for tpu_custom_call.1']
    #allocation15 [shape = 'u8[4096]{0}', space=vmem, size = 0x1000, scoped, tag = 'output window, operand 0, single buffered']
    %17 = vsyncpa [#allocation5], 0
    %18 = vsyncpa [#allocation8], 0
    %19 = vsyncpa [#allocation11], 0
    %20 = vsyncpa [#allocation14], 0
    %21 = vsyncpa [#allocation6], 0
    // Predicated region
    $region2: #{tpu_custom_call.1} parent=1 // pred_check
      _
    $region3: #{tpu_custom_call.1} parent=1 // pred_check_branch
      %23 = sbr.rel (0) target = $region5
    $region4: #{tpu_custom_call.1} parent=1 // pred_region
      %s25 = ssub.s32 2048, 2048
      %26 = vsyncadd [#allocation5], %s25
      %s27 = sshll.u32 [#allocation4], 4
      %s28 = int_to_ptr.vmem [resolvable:$true] %s27
      %33 = dma.hbm_to_vmem [thread:$0]  %s0, 2048, %s28, [#allocation5], 128, 128, 8
    $region5: #{tpu_custom_call.1} parent=1 // pred_fallthru
      _
    // Predicated region
    $region6: #{tpu_custom_call.1} parent=1 // pred_check
      _
    $region7: #{tpu_custom_call.1} parent=1 // pred_check_branch
      %35 = sbr.rel (0) target = $region9
    $region8: #{tpu_custom_call.1} parent=1 // pred_region
      %s37 = ssub.s32 128, 128
      %38 = vsyncadd [#allocation8], %s37
      %s39 = sshll.u32 [#allocation7], 4
      %s40 = int_to_ptr.vmem [resolvable:$true] %s39
      %45 = dma.hbm_to_vmem [thread:$0]  %s1, 128, %s40, [#allocation8], 16, 16, 1
    $region9: #{tpu_custom_call.1} parent=1 // pred_fallthru
      _
    // Predicated region
    $region10: #{tpu_custom_call.1} parent=1 // pred_check
      _
    $region11: #{tpu_custom_call.1} parent=1 // pred_check_branch
      %47 = sbr.rel (0) target = $region13
    $region12: #{tpu_custom_call.1} parent=1 // pred_region
      %s49 = ssub.s32 16, 16
      %50 = vsyncadd [#allocation8], %s49
      %s52 = sshll.u32 [#allocation9], 4
      %s53 = int_to_ptr.vmem [resolvable:$true] %s52
      %55 = dma.hbm_to_vmem [thread:$0]  %s2, 16, %s53, [#allocation8]
    $region13: #{tpu_custom_call.1} parent=1 // pred_fallthru
      _
    // Predicated region
    $region14: #{tpu_custom_call.1} parent=1 // pred_check
      _
    $region15: #{tpu_custom_call.1} parent=1 // pred_check_branch
      %57 = sbr.rel (0) target = $region17
    $region16: #{tpu_custom_call.1} parent=1 // pred_region
      _
    $region17: #{tpu_custom_call.1} parent=1 // pred_fallthru
      _
    // Predicated region
    $region18: #{tpu_custom_call.1} parent=1 // pred_check
      _
    $region19: #{tpu_custom_call.1} parent=1 // pred_check_branch
      %59 = sbr.rel (0) target = $region21
    $region20: #{tpu_custom_call.1} parent=1 // pred_region
      %s61 = ssub.s32 2048, 2048
      %62 = vsyncadd [#allocation11], %s61
      %s63 = sshll.u32 [#allocation10], 4
      %s64 = int_to_ptr.vmem [resolvable:$true] %s63
      %69 = dma.hbm_to_vmem [thread:$0]  %s4, 2048, %s64, [#allocation11], 128, 128, 8
    $region21: #{tpu_custom_call.1} parent=1 // pred_fallthru
      _
    // Predicated region
    $region22: #{tpu_custom_call.1} parent=1 // pred_check
      _
    $region23: #{tpu_custom_call.1} parent=1 // pred_check_branch
      %71 = sbr.rel (0) target = $region25
    $region24: #{tpu_custom_call.1} parent=1 // pred_region
      %s73 = ssub.s32 16, 16
      %74 = vsyncadd [#allocation11], %s73
      %s76 = sshll.u32 [#allocation12], 4
      %s77 = int_to_ptr.vmem [resolvable:$true] %s76
      %79 = dma.hbm_to_vmem [thread:$0]  %s5, 16, %s77, [#allocation11]
    $region25: #{tpu_custom_call.1} parent=1 // pred_fallthru
      _
    // Predicated region
    $region26: #{tpu_custom_call.1} parent=1 // pred_check
      _
    $region27: #{tpu_custom_call.1} parent=1 // pred_check_branch
      %81 = sbr.rel (0) target = $region29
    $region28: #{tpu_custom_call.1} parent=1 // pred_region
      %s83 = ssub.s32 16, 16
      %84 = vsyncadd [#allocation14], %s83
      %s86 = sshll.u32 [#allocation13], 4
      %s87 = int_to_ptr.vmem [resolvable:$true] %s86
      %89 = dma.hbm_to_vmem [thread:$0]  %s6, 16, %s87, [#allocation14]
    $region29: #{tpu_custom_call.1} parent=1 // pred_fallthru
      _
    // Predicated region
    $region30: #{tpu_custom_call.1} parent=1 // pred_check
      _
    $region31: #{tpu_custom_call.1} parent=1 // pred_check_branch
      %91 = sbr.rel (0) target = $region33
    $region32: #{tpu_custom_call.1} parent=1 // pred_region
      _
    $region33: #{tpu_custom_call.1} parent=1 // pred_fallthru
      _
    // Predicated region
    $region34: #{tpu_custom_call.1} parent=1 // pred_check
      _
    $region35: #{tpu_custom_call.1} parent=1 // pred_check_branch
      %93 = sbr.rel (0) target = $region37
    $region36: #{tpu_custom_call.1} parent=1 // pred_region
      %94 = dma.done [#allocation5], 2048
    $region37: #{tpu_custom_call.1} parent=1 // pred_fallthru
      _
    // Predicated region
    $region38: #{tpu_custom_call.1} parent=1 // pred_check
      _
    $region39: #{tpu_custom_call.1} parent=1 // pred_check_branch
      %96 = sbr.rel (0) target = $region41
    $region40: #{tpu_custom_call.1} parent=1 // pred_region
      %97 = dma.done [#allocation8], 128
    $region41: #{tpu_custom_call.1} parent=1 // pred_fallthru
      _
    // Predicated region
    $region42: #{tpu_custom_call.1} parent=1 // pred_check
      _
    $region43: #{tpu_custom_call.1} parent=1 // pred_check_branch
      %99 = sbr.rel (0) target = $region45
    $region44: #{tpu_custom_call.1} parent=1 // pred_region
      %100 = dma.done [#allocation8], 16
    $region45: #{tpu_custom_call.1} parent=1 // pred_fallthru
      _
    // Predicated region
    $region46: #{tpu_custom_call.1} parent=1 // pred_check
      _
    $region47: #{tpu_custom_call.1} parent=1 // pred_check_branch
      %102 = sbr.rel (0) target = $region49
    $region48: #{tpu_custom_call.1} parent=1 // pred_region
      %103 = dma.done [#allocation11], 2048
    $region49: #{tpu_custom_call.1} parent=1 // pred_fallthru
      _
    // Predicated region
    $region50: #{tpu_custom_call.1} parent=1 // pred_check
      _
    $region51: #{tpu_custom_call.1} parent=1 // pred_check_branch
      %105 = sbr.rel (0) target = $region53
    $region52: #{tpu_custom_call.1} parent=1 // pred_region
      %106 = dma.done [#allocation11], 16
    $region53: #{tpu_custom_call.1} parent=1 // pred_fallthru
      _
    // Predicated region
    $region54: #{tpu_custom_call.1} parent=1 // pred_check
      _
    $region55: #{tpu_custom_call.1} parent=1 // pred_check_branch
      %108 = sbr.rel (0) target = $region57
    $region56: #{tpu_custom_call.1} parent=1 // pred_region
      %109 = dma.done [#allocation14], 16
    $region57: #{tpu_custom_call.1} parent=1 // pred_fallthru
      _
    %v110 = vld [vmem:[#allocation4] sm:$0xff]
    %v111 = vld [vmem:[#allocation4 + $0x8] sm:$0xff]
    %v112 = vld [vmem:[#allocation4 + $0x10] sm:$0xff]
    %v113 = vld [vmem:[#allocation4 + $0x18] sm:$0xff]
    %v114 = vld [vmem:[#allocation4 + $0x20] sm:$0xff]
    %v115 = vld [vmem:[#allocation4 + $0x28] sm:$0xff]
    %v116 = vld [vmem:[#allocation4 + $0x30] sm:$0xff]
    %v117 = vld [vmem:[#allocation4 + $0x38] sm:$0xff]
    %v118 = vld [vmem:[#allocation4 + $0x40] sm:$0xff]
    %v119 = vld [vmem:[#allocation4 + $0x48] sm:$0xff]
    %v120 = vld [vmem:[#allocation4 + $0x50] sm:$0xff]
    %v121 = vld [vmem:[#allocation4 + $0x58] sm:$0xff]
    %v122 = vld [vmem:[#allocation4 + $0x60] sm:$0xff]
    %v123 = vld [vmem:[#allocation4 + $0x68] sm:$0xff]
    %v124 = vld [vmem:[#allocation4 + $0x70] sm:$0xff]
    %v125 = vld [vmem:[#allocation4 + $0x78] sm:$0xff]
    %v126 = vld [vmem:[#allocation7] sm:$0x1]
    %v127 = vld [vmem:[#allocation7 + $0x1] sm:$0x1]
    %v128 = vld [vmem:[#allocation7 + $0x2] sm:$0x1]
    %v129 = vld [vmem:[#allocation7 + $0x3] sm:$0x1]
    %v130 = vld [vmem:[#allocation7 + $0x4] sm:$0x1]
    %v131 = vld [vmem:[#allocation7 + $0x5] sm:$0x1]
    %v132 = vld [vmem:[#allocation7 + $0x6] sm:$0x1]
    %v133 = vld [vmem:[#allocation7 + $0x7] sm:$0x1]
    %v134 = vld [vmem:[#allocation9] sm:$0x1]
    %v136 = vlaneseq
    %v137 = vshrl.u32 %v136, 7
    %v138 = vsub.s32 0, %v137
    %v139 = vrot.slane %v134, %v138
    %v141 = vmul.f32 %v110, %v139
    %v142 = vmul.f32 %v111, %v139
    %v143 = vmul.f32 %v112, %v139
    %v144 = vmul.f32 %v113, %v139
    %v145 = vmul.f32 %v114, %v139
    %v146 = vmul.f32 %v115, %v139
    %v147 = vmul.f32 %v116, %v139
    %v148 = vmul.f32 %v117, %v139
    %v149 = vmul.f32 %v118, %v139
    %v150 = vmul.f32 %v119, %v139
    %v151 = vmul.f32 %v120, %v139
    %v152 = vmul.f32 %v121, %v139
    %v153 = vmul.f32 %v122, %v139
    %v154 = vmul.f32 %v123, %v139
    %v155 = vmul.f32 %v124, %v139
    %v156 = vmul.f32 %v125, %v139
    %157 = vadd.xlane.f32.xlu0 %v141
    %v158 = vpop.xlane.xlu0 %157
    %159 = vadd.xlane.f32.xlu0 %v142
    %v160 = vpop.xlane.xlu0 %159
    %161 = vadd.xlane.f32.xlu0 %v143
    %v162 = vpop.xlane.xlu0 %161
    %163 = vadd.xlane.f32.xlu0 %v144
    %v164 = vpop.xlane.xlu0 %163
    %165 = vadd.xlane.f32.xlu0 %v145
    %v166 = vpop.xlane.xlu0 %165
    %167 = vadd.xlane.f32.xlu0 %v146
    %v168 = vpop.xlane.xlu0 %167
    %169 = vadd.xlane.f32.xlu0 %v147
    %v170 = vpop.xlane.xlu0 %169
    %171 = vadd.xlane.f32.xlu0 %v148
    %v172 = vpop.xlane.xlu0 %171
    %173 = vadd.xlane.f32.xlu0 %v149
    %v174 = vpop.xlane.xlu0 %173
    %175 = vadd.xlane.f32.xlu0 %v150
    %v176 = vpop.xlane.xlu0 %175
    %177 = vadd.xlane.f32.xlu0 %v151
    %v178 = vpop.xlane.xlu0 %177
    %179 = vadd.xlane.f32.xlu0 %v152
    %v180 = vpop.xlane.xlu0 %179
    %181 = vadd.xlane.f32.xlu0 %v153
    %v182 = vpop.xlane.xlu0 %181
    %183 = vadd.xlane.f32.xlu0 %v154
    %v184 = vpop.xlane.xlu0 %183
    %185 = vadd.xlane.f32.xlu0 %v155
    %v186 = vpop.xlane.xlu0 %185
    %187 = vadd.xlane.f32.xlu0 %v156
    %v188 = vpop.xlane.xlu0 %187
    %v189 = vld [vmem:[#allocation2] sm:$0x1]
    %v191 = vlaneseq
    %v192 = vshrl.u32 %v191, 7
    %v193 = vsub.s32 0, %v192
    %v194 = vrot.slane %v189, %v193
    %v196 = vadd.f32 %v158, %v194
    %v197 = vadd.f32 %v160, %v194
    %v198 = vadd.f32 %v162, %v194
    %v199 = vadd.f32 %v164, %v194
    %v200 = vadd.f32 %v166, %v194
    %v201 = vadd.f32 %v168, %v194
    %v202 = vadd.f32 %v170, %v194
    %v203 = vadd.f32 %v172, %v194
    %v204 = vadd.f32 %v174, %v194
    %v205 = vadd.f32 %v176, %v194
    %v206 = vadd.f32 %v178, %v194
    %v207 = vadd.f32 %v180, %v194
    %v208 = vadd.f32 %v182, %v194
    %v209 = vadd.f32 %v184, %v194
    %v210 = vadd.f32 %v186, %v194
    %v211 = vadd.f32 %v188, %v194
    %v212 = vlaneseq
    %v213 = vshrl.u32 %v212, 7
    %v214 = vadd.s32 %v213, 8
    %v215 = vlaneseq
    %v216 = vshrl.u32 %v215, 7
    %v217 = vsub.s32 0, %v216
    %v218 = vrot.slane %v126, %v217
    %v219 = vlaneseq
    %v220 = vshrl.u32 %v219, 7
    %v221 = vsub.s32 0, %v220
    %v222 = vrot.slane %v127, %v221
    %v223 = vlaneseq
    %v224 = vshrl.u32 %v223, 7
    %v225 = vsub.s32 0, %v224
    %v226 = vrot.slane %v128, %v225
    %v227 = vlaneseq
    %v228 = vshrl.u32 %v227, 7
    %v229 = vsub.s32 0, %v228
    %v230 = vrot.slane %v129, %v229
    %v231 = vlaneseq
    %v232 = vshrl.u32 %v231, 7
    %v233 = vsub.s32 0, %v232
    %v234 = vrot.slane %v130, %v233
    %v235 = vlaneseq
    %v236 = vshrl.u32 %v235, 7
    %v237 = vsub.s32 0, %v236
    %v238 = vrot.slane %v131, %v237
    %v239 = vlaneseq
    %v240 = vshrl.u32 %v239, 7
    %v241 = vsub.s32 0, %v240
    %v242 = vrot.slane %v132, %v241
    %v243 = vlaneseq
    %v244 = vshrl.u32 %v243, 7
    %v245 = vsub.s32 0, %v244
    %v246 = vrot.slane %v133, %v245
    %vm247 = vcmp.lt.s32.totalorder %v213, %v218
    %vm248 = vcmp.lt.s32.totalorder %v214, %v218
    %vm249 = vcmp.lt.s32.totalorder %v213, %v222
    %vm250 = vcmp.lt.s32.totalorder %v214, %v222
    %vm251 = vcmp.lt.s32.totalorder %v213, %v226
    %vm252 = vcmp.lt.s32.totalorder %v214, %v226
    %vm253 = vcmp.lt.s32.totalorder %v213, %v230
    %vm254 = vcmp.lt.s32.totalorder %v214, %v230
    %vm255 = vcmp.lt.s32.totalorder %v213, %v234
    %vm256 = vcmp.lt.s32.totalorder %v214, %v234
    %vm257 = vcmp.lt.s32.totalorder %v213, %v238
    %vm258 = vcmp.lt.s32.totalorder %v214, %v238
    %vm259 = vcmp.lt.s32.totalorder %v213, %v242
    %vm260 = vcmp.lt.s32.totalorder %v214, %v242
    %vm261 = vcmp.lt.s32.totalorder %v213, %v246
    %vm262 = vcmp.lt.s32.totalorder %v214, %v246
    %v263 = vsel %vm247, %v196, -inf
    %v264 = vsel %vm248, %v197, -inf
    %v265 = vsel %vm249, %v198, -inf
    %v266 = vsel %vm250, %v199, -inf
    %v267 = vsel %vm251, %v200, -inf
    %v268 = vsel %vm252, %v201, -inf
    %v269 = vsel %vm253, %v202, -inf
    %v270 = vsel %vm254, %v203, -inf
    %v271 = vsel %vm255, %v204, -inf
    %v272 = vsel %vm256, %v205, -inf
    %v273 = vsel %vm257, %v206, -inf
    %v274 = vsel %vm258, %v207, -inf
    %v275 = vsel %vm259, %v208, -inf
    %v276 = vsel %vm260, %v209, -inf
    %v277 = vsel %vm261, %v210, -inf
    %v278 = vsel %vm262, %v211, -inf
    %vm279 = vcmask 7168
    %v280 = vsel %vm279, %v263, -inf
    %v281 = vsel %vm279, %v264, -inf
    %v282 = vmax.f32 %v280, %v281
    %v283 = vrot.slane %v282, 4
    %v284 = vmax.f32 %v282, %v283
    %v285 = vrot.slane %v284, 2
    %v286 = vmax.f32 %v284, %v285
    %v287 = vrot.slane %v286, 1
    %v288 = vmax.f32 %v286, %v287
    %v289 = vsel %vm279, %v265, -inf
    %v290 = vsel %vm279, %v266, -inf
    %v291 = vmax.f32 %v289, %v290
    %v292 = vrot.slane %v291, 4
    %v293 = vmax.f32 %v291, %v292
    %v294 = vrot.slane %v293, 2
    %v295 = vmax.f32 %v293, %v294
    %v296 = vrot.slane %v295, 1
    %v297 = vmax.f32 %v295, %v296
    %v298 = vsel %vm279, %v267, -inf
    %v299 = vsel %vm279, %v268, -inf
    %v300 = vmax.f32 %v298, %v299
    %v301 = vrot.slane %v300, 4
    %v302 = vmax.f32 %v300, %v301
    %v303 = vrot.slane %v302, 2
    %v304 = vmax.f32 %v302, %v303
    %v305 = vrot.slane %v304, 1
    %v306 = vmax.f32 %v304, %v305
    %v307 = vsel %vm279, %v269, -inf
    %v308 = vsel %vm279, %v270, -inf
    %v309 = vmax.f32 %v307, %v308
    %v310 = vrot.slane %v309, 4
    %v311 = vmax.f32 %v309, %v310
    %v312 = vrot.slane %v311, 2
    %v313 = vmax.f32 %v311, %v312
    %v314 = vrot.slane %v313, 1
    %v315 = vmax.f32 %v313, %v314
    %v316 = vsel %vm279, %v271, -inf
    %v317 = vsel %vm279, %v272, -inf
    %v318 = vmax.f32 %v316, %v317
    %v319 = vrot.slane %v318, 4
    %v320 = vmax.f32 %v318, %v319
    %v321 = vrot.slane %v320, 2
    %v322 = vmax.f32 %v320, %v321
    %v323 = vrot.slane %v322, 1
    %v324 = vmax.f32 %v322, %v323
    %v325 = vsel %vm279, %v273, -inf
    %v326 = vsel %vm279, %v274, -inf
    %v327 = vmax.f32 %v325, %v326
    %v328 = vrot.slane %v327, 4
    %v329 = vmax.f32 %v327, %v328
    %v330 = vrot.slane %v329, 2
    %v331 = vmax.f32 %v329, %v330
    %v332 = vrot.slane %v331, 1
    %v333 = vmax.f32 %v331, %v332
    %v334 = vsel %vm279, %v275, -inf
    %v335 = vsel %vm279, %v276, -inf
    %v336 = vmax.f32 %v334, %v335
    %v337 = vrot.slane %v336, 4
    %v338 = vmax.f32 %v336, %v337
    %v339 = vrot.slane %v338, 2
    %v340 = vmax.f32 %v338, %v339
    %v341 = vrot.slane %v340, 1
    %v342 = vmax.f32 %v340, %v341
    %v343 = vsel %vm279, %v277, -inf
    %v344 = vsel %vm279, %v278, -inf
    %v345 = vmax.f32 %v343, %v344
    %v346 = vrot.slane %v345, 4
    %v347 = vmax.f32 %v345, %v346
    %v348 = vrot.slane %v347, 2
    %v349 = vmax.f32 %v347, %v348
    %v350 = vrot.slane %v349, 1
    %v351 = vmax.f32 %v349, %v350
    %v352 = vsub.f32 %v263, %v288
    %v353 = vsub.f32 %v264, %v288
    %v354 = vsub.f32 %v265, %v297
    %v355 = vsub.f32 %v266, %v297
    %v356 = vsub.f32 %v267, %v306
    %v357 = vsub.f32 %v268, %v306
    %v358 = vsub.f32 %v269, %v315
    %v359 = vsub.f32 %v270, %v315
    %v360 = vsub.f32 %v271, %v324
    %v361 = vsub.f32 %v272, %v324
    %v362 = vsub.f32 %v273, %v333
    %v363 = vsub.f32 %v274, %v333
    %v364 = vsub.f32 %v275, %v342
    %v365 = vsub.f32 %v276, %v342
    %v366 = vsub.f32 %v277, %v351
    %v367 = vsub.f32 %v278, %v351
    %v368 = vmul.f32 %v352, 1.442695
    %v369 = vpow.pop %v368
    %v370 = vmul.f32 %v353, 1.442695
    %v371 = vpow.pop %v370
    %v372 = vmul.f32 %v354, 1.442695
    %v373 = vpow.pop %v372
    %v374 = vmul.f32 %v355, 1.442695
    %v375 = vpow.pop %v374
    %v376 = vmul.f32 %v356, 1.442695
    %v377 = vpow.pop %v376
    %v378 = vmul.f32 %v357, 1.442695
    %v379 = vpow.pop %v378
    %v380 = vmul.f32 %v358, 1.442695
    %v381 = vpow.pop %v380
    %v382 = vmul.f32 %v359, 1.442695
    %v383 = vpow.pop %v382
    %v384 = vmul.f32 %v360, 1.442695
    %v385 = vpow.pop %v384
    %v386 = vmul.f32 %v361, 1.442695
    %v387 = vpow.pop %v386
    %v388 = vmul.f32 %v362, 1.442695
    %v389 = vpow.pop %v388
    %v390 = vmul.f32 %v363, 1.442695
    %v391 = vpow.pop %v390
    %v392 = vmul.f32 %v364, 1.442695
    %v393 = vpow.pop %v392
    %v394 = vmul.f32 %v365, 1.442695
    %v395 = vpow.pop %v394
    %v396 = vmul.f32 %v366, 1.442695
    %v397 = vpow.pop %v396
    %v398 = vmul.f32 %v367, 1.442695
    %v399 = vpow.pop %v398
    %v400 = vsel %vm279, %v369, 0.0
    %v401 = vsel %vm279, %v371, 0.0
    %v402 = vadd.f32 %v400, %v401
    %v403 = vrot.slane %v402, 4
    %v404 = vadd.f32 %v402, %v403
    %v405 = vrot.slane %v404, 2
    %v406 = vadd.f32 %v404, %v405
    %v407 = vrot.slane %v406, 1
    %v408 = vadd.f32 %v406, %v407
    %v409 = vsel %vm279, %v373, 0.0
    %v410 = vsel %vm279, %v375, 0.0
    %v411 = vadd.f32 %v409, %v410
    %v412 = vrot.slane %v411, 4
    %v413 = vadd.f32 %v411, %v412
    %v414 = vrot.slane %v413, 2
    %v415 = vadd.f32 %v413, %v414
    %v416 = vrot.slane %v415, 1
    %v417 = vadd.f32 %v415, %v416
    %v418 = vsel %vm279, %v377, 0.0
    %v419 = vsel %vm279, %v379, 0.0
    %v420 = vadd.f32 %v418, %v419
    %v421 = vrot.slane %v420, 4
    %v422 = vadd.f32 %v420, %v421
    %v423 = vrot.slane %v422, 2
    %v424 = vadd.f32 %v422, %v423
    %v425 = vrot.slane %v424, 1
    %v426 = vadd.f32 %v424, %v425
    %v427 = vsel %vm279, %v381, 0.0
    %v428 = vsel %vm279, %v383, 0.0
    %v429 = vadd.f32 %v427, %v428
    %v430 = vrot.slane %v429, 4
    %v431 = vadd.f32 %v429, %v430
    %v432 = vrot.slane %v431, 2
    %v433 = vadd.f32 %v431, %v432
    %v434 = vrot.slane %v433, 1
    %v435 = vadd.f32 %v433, %v434
    %v436 = vsel %vm279, %v385, 0.0
    %v437 = vsel %vm279, %v387, 0.0
    %v438 = vadd.f32 %v436, %v437
    %v439 = vrot.slane %v438, 4
    %v440 = vadd.f32 %v438, %v439
    %v441 = vrot.slane %v440, 2
    %v442 = vadd.f32 %v440, %v441
    %v443 = vrot.slane %v442, 1
    %v444 = vadd.f32 %v442, %v443
    %v445 = vsel %vm279, %v389, 0.0
    %v446 = vsel %vm279, %v391, 0.0
    %v447 = vadd.f32 %v445, %v446
    %v448 = vrot.slane %v447, 4
    %v449 = vadd.f32 %v447, %v448
    %v450 = vrot.slane %v449, 2
    %v451 = vadd.f32 %v449, %v450
    %v452 = vrot.slane %v451, 1
    %v453 = vadd.f32 %v451, %v452
    %v454 = vsel %vm279, %v393, 0.0
    %v455 = vsel %vm279, %v395, 0.0
    %v456 = vadd.f32 %v454, %v455
    %v457 = vrot.slane %v456, 4
    %v458 = vadd.f32 %v456, %v457
    %v459 = vrot.slane %v458, 2
    %v460 = vadd.f32 %v458, %v459
    %v461 = vrot.slane %v460, 1
    %v462 = vadd.f32 %v460, %v461
    %v463 = vsel %vm279, %v397, 0.0
    %v464 = vsel %vm279, %v399, 0.0
    %v465 = vadd.f32 %v463, %v464
    %v466 = vrot.slane %v465, 4
    %v467 = vadd.f32 %v465, %v466
    %v468 = vrot.slane %v467, 2
    %v469 = vadd.f32 %v467, %v468
    %v470 = vrot.slane %v469, 1
    %v471 = vadd.f32 %v469, %v470
    %473 = vset.pattern.permute.xlu0 0
    %474 = vperm.xlu0 %473, %v369
    %v475 = vpop.permute.xlu0 %474
    %478 = vset.pattern.permute.xlu0 0
    %479 = vperm.xlu0 %478, %v371
    %v480 = vpop.permute.xlu0 %479
    %483 = vset.pattern.permute.xlu0 0
    %484 = vperm.xlu0 %483, %v373
    %v485 = vpop.permute.xlu0 %484
    %488 = vset.pattern.permute.xlu0 0
    %489 = vperm.xlu0 %488, %v375
    %v490 = vpop.permute.xlu0 %489
    %493 = vset.pattern.permute.xlu0 0
    %494 = vperm.xlu0 %493, %v377
    %v495 = vpop.permute.xlu0 %494
    %498 = vset.pattern.permute.xlu0 0
    %499 = vperm.xlu0 %498, %v379
    %v500 = vpop.permute.xlu0 %499
    %503 = vset.pattern.permute.xlu0 0
    %504 = vperm.xlu0 %503, %v381
    %v505 = vpop.permute.xlu0 %504
    %508 = vset.pattern.permute.xlu0 0
    %509 = vperm.xlu0 %508, %v383
    %v510 = vpop.permute.xlu0 %509
    %513 = vset.pattern.permute.xlu0 0
    %514 = vperm.xlu0 %513, %v385
    %v515 = vpop.permute.xlu0 %514
    %518 = vset.pattern.permute.xlu0 0
    %519 = vperm.xlu0 %518, %v387
    %v520 = vpop.permute.xlu0 %519
    %523 = vset.pattern.permute.xlu0 0
    %524 = vperm.xlu0 %523, %v389
    %v525 = vpop.permute.xlu0 %524
    %528 = vset.pattern.permute.xlu0 0
    %529 = vperm.xlu0 %528, %v391
    %v530 = vpop.permute.xlu0 %529
    %533 = vset.pattern.permute.xlu0 0
    %534 = vperm.xlu0 %533, %v393
    %v535 = vpop.permute.xlu0 %534
    %538 = vset.pattern.permute.xlu0 0
    %539 = vperm.xlu0 %538, %v395
    %v540 = vpop.permute.xlu0 %539
    %543 = vset.pattern.permute.xlu0 0
    %544 = vperm.xlu0 %543, %v397
    %v545 = vpop.permute.xlu0 %544
    %548 = vset.pattern.permute.xlu0 0
    %549 = vperm.xlu0 %548, %v399
    %v550 = vpop.permute.xlu0 %549
    %v552 = vmul.f32 %v475, %v110
    %v553 = vmul.f32 %v480, %v111
    %v554 = vmul.f32 %v485, %v112
    %v555 = vmul.f32 %v490, %v113
    %v556 = vmul.f32 %v495, %v114
    %v557 = vmul.f32 %v500, %v115
    %v558 = vmul.f32 %v505, %v116
    %v559 = vmul.f32 %v510, %v117
    %v560 = vmul.f32 %v515, %v118
    %v561 = vmul.f32 %v520, %v119
    %v562 = vmul.f32 %v525, %v120
    %v563 = vmul.f32 %v530, %v121
    %v564 = vmul.f32 %v535, %v122
    %v565 = vmul.f32 %v540, %v123
    %v566 = vmul.f32 %v545, %v124
    %v567 = vmul.f32 %v550, %v125
    %v568 = vadd.f32 %v552, %v553
    %v569 = vrot.slane %v568, 4
    %v570 = vadd.f32 %v568, %v569
    %v571 = vrot.slane %v570, 2
    %v572 = vadd.f32 %v570, %v571
    %v573 = vrot.slane %v572, 1
    %v574 = vadd.f32 %v572, %v573
    %v575 = vadd.f32 %v554, %v555
    %v576 = vrot.slane %v575, 4
    %v577 = vadd.f32 %v575, %v576
    %v578 = vrot.slane %v577, 2
    %v579 = vadd.f32 %v577, %v578
    %v580 = vrot.slane %v579, 1
    %v581 = vadd.f32 %v579, %v580
    %v582 = vadd.f32 %v556, %v557
    %v583 = vrot.slane %v582, 4
    %v584 = vadd.f32 %v582, %v583
    %v585 = vrot.slane %v584, 2
    %v586 = vadd.f32 %v584, %v585
    %v587 = vrot.slane %v586, 1
    %v588 = vadd.f32 %v586, %v587
    %v589 = vadd.f32 %v558, %v559
    %v590 = vrot.slane %v589, 4
    %v591 = vadd.f32 %v589, %v590
    %v592 = vrot.slane %v591, 2
    %v593 = vadd.f32 %v591, %v592
    %v594 = vrot.slane %v593, 1
    %v595 = vadd.f32 %v593, %v594
    %v596 = vadd.f32 %v560, %v561
    %v597 = vrot.slane %v596, 4
    %v598 = vadd.f32 %v596, %v597
    %v599 = vrot.slane %v598, 2
    %v600 = vadd.f32 %v598, %v599
    %v601 = vrot.slane %v600, 1
    %v602 = vadd.f32 %v600, %v601
    %v603 = vadd.f32 %v562, %v563
    %v604 = vrot.slane %v603, 4
    %v605 = vadd.f32 %v603, %v604
    %v606 = vrot.slane %v605, 2
    %v607 = vadd.f32 %v605, %v606
    %v608 = vrot.slane %v607, 1
    %v609 = vadd.f32 %v607, %v608
    %v610 = vadd.f32 %v564, %v565
    %v611 = vrot.slane %v610, 4
    %v612 = vadd.f32 %v610, %v611
    %v613 = vrot.slane %v612, 2
    %v614 = vadd.f32 %v612, %v613
    %v615 = vrot.slane %v614, 1
    %v616 = vadd.f32 %v614, %v615
    %v617 = vadd.f32 %v566, %v567
    %v618 = vrot.slane %v617, 4
    %v619 = vadd.f32 %v617, %v618
    %v620 = vrot.slane %v619, 2
    %v621 = vadd.f32 %v619, %v620
    %v622 = vrot.slane %v621, 1
    %v623 = vadd.f32 %v621, %v622
    %v624 = vrcp.pop %v408
    %v625 = vrcp.pop %v417
    %v626 = vrcp.pop %v426
    %v627 = vrcp.pop %v435
    %v628 = vrcp.pop %v444
    %v629 = vrcp.pop %v453
    %v630 = vrcp.pop %v462
    %v631 = vrcp.pop %v471
    %633 = vset.pattern.permute.xlu0 0
    %634 = vperm.xlu0 %633, %v624
    %v635 = vpop.permute.xlu0 %634
    %638 = vset.pattern.permute.xlu0 0
    %639 = vperm.xlu0 %638, %v625
    %v640 = vpop.permute.xlu0 %639
    %643 = vset.pattern.permute.xlu0 0
    %644 = vperm.xlu0 %643, %v626
    %v645 = vpop.permute.xlu0 %644
    %648 = vset.pattern.permute.xlu0 0
    %649 = vperm.xlu0 %648, %v627
    %v650 = vpop.permute.xlu0 %649
    %653 = vset.pattern.permute.xlu0 0
    %654 = vperm.xlu0 %653, %v628
    %v655 = vpop.permute.xlu0 %654
    %658 = vset.pattern.permute.xlu0 0
    %659 = vperm.xlu0 %658, %v629
    %v660 = vpop.permute.xlu0 %659
    %663 = vset.pattern.permute.xlu0 0
    %664 = vperm.xlu0 %663, %v630
    %v665 = vpop.permute.xlu0 %664
    %668 = vset.pattern.permute.xlu0 0
    %669 = vperm.xlu0 %668, %v631
    %v670 = vpop.permute.xlu0 %669
    %v672 = vmul.f32 %v574, %v635
    %v673 = vmul.f32 %v581, %v640
    %v674 = vmul.f32 %v588, %v645
    %v675 = vmul.f32 %v595, %v650
    %v676 = vmul.f32 %v602, %v655
    %v677 = vmul.f32 %v609, %v660
    %v678 = vmul.f32 %v616, %v665
    %v679 = vmul.f32 %v623, %v670
    %v680 = vld [vmem:[#allocation10] sm:$0xff]
    %v681 = vld [vmem:[#allocation10 + $0x8] sm:$0xff]
    %v682 = vld [vmem:[#allocation10 + $0x10] sm:$0xff]
    %v683 = vld [vmem:[#allocation10 + $0x18] sm:$0xff]
    %v684 = vld [vmem:[#allocation10 + $0x20] sm:$0xff]
    %v685 = vld [vmem:[#allocation10 + $0x28] sm:$0xff]
    %v686 = vld [vmem:[#allocation10 + $0x30] sm:$0xff]
    %v687 = vld [vmem:[#allocation10 + $0x38] sm:$0xff]
    %v688 = vld [vmem:[#allocation10 + $0x40] sm:$0xff]
    %v689 = vld [vmem:[#allocation10 + $0x48] sm:$0xff]
    %v690 = vld [vmem:[#allocation10 + $0x50] sm:$0xff]
    %v691 = vld [vmem:[#allocation10 + $0x58] sm:$0xff]
    %v692 = vld [vmem:[#allocation10 + $0x60] sm:$0xff]
    %v693 = vld [vmem:[#allocation10 + $0x68] sm:$0xff]
    %v694 = vld [vmem:[#allocation10 + $0x70] sm:$0xff]
    %v695 = vld [vmem:[#allocation10 + $0x78] sm:$0xff]
    %v696 = vld [vmem:[#allocation12] sm:$0x1]
    %v698 = vlaneseq
    %v699 = vshrl.u32 %v698, 7
    %v700 = vsub.s32 0, %v699
    %v701 = vrot.slane %v696, %v700
    %vm711 = vcmask 1041409
    %v712 = vsel %vm711, %v673, %v672
    %vm713 = vcmask 1042434
    %v714 = vsel %vm713, %v674, %v712
    %vm715 = vcmask 1043459
    %v716 = vsel %vm715, %v675, %v714
    %vm717 = vcmask 1044484
    %v718 = vsel %vm717, %v676, %v716
    %vm719 = vcmask 1045509
    %v720 = vsel %vm719, %v677, %v718
    %vm721 = vcmask 1046534
    %v722 = vsel %vm721, %v678, %v720
    %vm723 = vcmask 1047559
    %v724 = vsel %vm723, %v679, %v722
    %726 = vmatprep.subr.mxu0 0.0
    %727 = vmatpush1.msra.mxu0 %v680
    %728 = vmatprep.subr.mxu0 0.0
    %729 = vmatpush1.msra.mxu0 %v681
    %730 = vmatprep.subr.mxu0 0.0
    %731 = vmatpush1.msra.mxu0 %v682
    %732 = vmatprep.subr.mxu0 0.0
    %733 = vmatpush1.msra.mxu0 %v683
    %734 = vmatprep.subr.mxu0 0.0
    %735 = vmatpush1.msra.mxu0 %v684
    %736 = vmatprep.subr.mxu0 0.0
    %737 = vmatpush1.msra.mxu0 %v685
    %738 = vmatprep.subr.mxu0 0.0
    %739 = vmatpush1.msra.mxu0 %v686
    %740 = vmatprep.subr.mxu0 0.0
    %741 = vmatpush1.msra.mxu0 %v687
    %742 = vmatprep.subr.mxu0 0.0
    %743 = vmatpush1.msra.mxu0 %v688
    %744 = vmatprep.subr.mxu0 0.0
    %745 = vmatpush1.msra.mxu0 %v689
    %746 = vmatprep.subr.mxu0 0.0
    %747 = vmatpush1.msra.mxu0 %v690
    %748 = vmatprep.subr.mxu0 0.0
    %749 = vmatpush1.msra.mxu0 %v691
    %750 = vmatprep.subr.mxu0 0.0
    %751 = vmatpush1.msra.mxu0 %v692
    %752 = vmatprep.subr.mxu0 0.0
    %753 = vmatpush1.msra.mxu0 %v693
    %754 = vmatprep.subr.mxu0 0.0
    %755 = vmatpush1.msra.mxu0 %v694
    %756 = vmatprep.subr.mxu0 0.0
    %757 = vmatpush1.msra.mxu0 %v695
    %758 = vmatprep.subr.mxu0 0.0
    %759 = vmatpush1.msra.mxu0 0.0
    %760 = vmatprep.subr.mxu0 0.0
    %761 = vmatpush1.msra.mxu0 0.0
    %762 = vmatprep.subr.mxu0 0.0
    %763 = vmatpush1.msra.mxu0 0.0
    %764 = vmatprep.subr.mxu0 0.0
    %765 = vmatpush1.msra.mxu0 0.0
    %766 = vmatprep.subr.mxu0 0.0
    %767 = vmatpush1.msra.mxu0 0.0
    %768 = vmatprep.subr.mxu0 0.0
    %769 = vmatpush1.msra.mxu0 0.0
    %770 = vmatprep.subr.mxu0 0.0
    %771 = vmatpush1.msra.mxu0 0.0
    %772 = vmatprep.subr.mxu0 0.0
    %773 = vmatpush1.msra.mxu0 0.0
    %774 = vmatprep.subr.mxu0 0.0
    %775 = vmatpush1.msra.mxu0 0.0
    %776 = vmatprep.subr.mxu0 0.0
    %777 = vmatpush1.msra.mxu0 0.0
    %778 = vmatprep.subr.mxu0 0.0
    %779 = vmatpush1.msra.mxu0 0.0
    %780 = vmatprep.subr.mxu0 0.0
    %781 = vmatpush1.msra.mxu0 0.0
    %782 = vmatprep.subr.mxu0 0.0
    %783 = vmatpush1.msra.mxu0 0.0
    %784 = vmatprep.subr.mxu0 0.0
    %785 = vmatpush1.msra.mxu0 0.0
    %786 = vmatprep.subr.mxu0 0.0
    %787 = vmatpush1.msra.mxu0 0.0
    %788 = vmatprep.subr.mxu0 0.0
    %789 = vmatpush1.msra.mxu0 0.0
    %790 = vmatprep.mubr.f32.mxu0 0.0
    %791 = vmatmul.mubr.f32.gmra.mrb[0].mxu0 %v724
    %v792 = vpop.f32.mrb[0].mxu0
    %v793 = vadd.f32 %v701, %v792
    %v794 = vpop.f32.mrb[0].mxu0
    %795 = vdwg.mxu0
    %v796 = vmax.f32 %v793, 0.0
    %v797 = vld [vmem:[#allocation13] sm:$0x1]
    %v799 = vlaneseq
    %v800 = vshrl.u32 %v799, 7
    %v801 = vsub.s32 0, %v800
    %v802 = vrot.slane %v797, %v801
    %v804 = vmul.f32 %v796, %v802
    %805 = vadd.xlane.f32.xlu0 %v804
    %v806 = vpop.xlane.xlu0 %805
    %v807 = vld [vmem:[#allocation3] sm:$0x1]
    %v809 = vlaneseq
    %v810 = vshrl.u32 %v809, 7
    %v811 = vsub.s32 0, %v810
    %v812 = vrot.slane %v807, %v811
    %v814 = vadd.f32 %v806, %v812
    %v816 = vcombine.high %v814, %v814
    %v818 = vunpack.c.l.s4 1966171168
    %v819 = vunpack.c.0.s8 %v818
    %v820 = vlaneseq
    %v821 = vshrl.u32 %v820, 7
    %v822 = vsub.s32 %v819, %v821
    %v823 = vrot.slane %v814, %v822
    %v825 = vunpack.c.l.s4 1966171168
    %v826 = vunpack.c.0.s8 %v825
    %v827 = vlaneseq
    %v828 = vshrl.u32 %v827, 7
    %v829 = vsub.s32 %v826, %v828
    %v830 = vrot.slane %v816, %v829
    %v831 = vcombine.high %v823, %v823
    %v832 = vcombine.high %v830, %v830
    %v834 = vunpack.c.l.s4 1966171168
    %v835 = vunpack.c.0.s8 %v834
    %v836 = vlaneseq
    %v837 = vshrl.u32 %v836, 7
    %v838 = vsub.s32 %v835, %v837
    %v839 = vrot.slane %v823, %v838
    %v841 = vunpack.c.l.s4 1966171168
    %v842 = vunpack.c.0.s8 %v841
    %v843 = vlaneseq
    %v844 = vshrl.u32 %v843, 7
    %v845 = vsub.s32 %v842, %v844
    %v846 = vrot.slane %v830, %v845
    %v848 = vunpack.c.l.s4 1966171168
    %v849 = vunpack.c.0.s8 %v848
    %v850 = vlaneseq
    %v851 = vshrl.u32 %v850, 7
    %v852 = vsub.s32 %v849, %v851
    %v853 = vrot.slane %v831, %v852
    %v855 = vunpack.c.l.s4 1966171168
    %v856 = vunpack.c.0.s8 %v855
    %v857 = vlaneseq
    %v858 = vshrl.u32 %v857, 7
    %v859 = vsub.s32 %v856, %v858
    %v860 = vrot.slane %v832, %v859
    %v861 = vcombine.high %v839, %v839
    %v862 = vcombine.high %v846, %v846
    %v863 = vcombine.high %v853, %v853
    %v864 = vcombine.high %v860, %v860
    %vm873 = vcmask 0
    %874 = vst.msk [vmem:[#allocation15] sm:$0x1] %vm873, %v839
    %875 = vst.msk [vmem:[#allocation15 + $0x1] sm:$0x1] %vm873, %v853
    %876 = vst.msk [vmem:[#allocation15 + $0x2] sm:$0x1] %vm873, %v861
    %877 = vst.msk [vmem:[#allocation15 + $0x3] sm:$0x1] %vm873, %v863
    %878 = vst.msk [vmem:[#allocation15 + $0x4] sm:$0x1] %vm873, %v846
    %879 = vst.msk [vmem:[#allocation15 + $0x5] sm:$0x1] %vm873, %v860
    %880 = vst.msk [vmem:[#allocation15 + $0x6] sm:$0x1] %vm873, %v862
    %881 = vst.msk [vmem:[#allocation15 + $0x7] sm:$0x1] %vm873, %v864
    // Predicated region
    $region58: #{tpu_custom_call.1} parent=1 // pred_check
      _
    $region59: #{tpu_custom_call.1} parent=1 // pred_check_branch
      %883 = sbr.rel (0) target = $region61
    $region60: #{tpu_custom_call.1} parent=1 // pred_region
      %s885 = ssub.s32 128, 128
      %886 = vsyncadd [#allocation6], %s885
      %s887 = sshll.u32 [#allocation15], 4
      %s888 = int_to_ptr.vmem [resolvable:$true] %s887
      %893 = dma.vmem_to_hbm [thread:$0]  %s888, 128, %s8, [#allocation6], 16, 16, 1
    $region61: #{tpu_custom_call.1} parent=1 // pred_fallthru
      _
    // Predicated region
    $region62: #{tpu_custom_call.1} parent=1 // pred_check
      _
    $region63: #{tpu_custom_call.1} parent=1 // pred_check_branch
      %895 = sbr.rel (0) target = $region65
    $region64: #{tpu_custom_call.1} parent=1 // pred_region
      %896 = dma.done [#allocation6], 128
    $region65: #{tpu_custom_call.1} parent=1 // pred_fallthru
      _
    %897 = vsyncpa [#allocation5], 1
    %898 = vsyncpa [#allocation8], 1
    %899 = vsyncpa [#allocation11], 1
    %900 = vsyncpa [#allocation14], 1
    %901 = vsyncpa [#allocation6], 1

</llo_original>
